<compile_context>
chip_gen: v7x
topology: tpu7x:2x2x1
jax: 0.10.0
libtpu: 0.0.40
codegen_flags: <defaults>
</compile_context>

<pallas_src>
import functools

import jax
import jax.numpy as jnp
import numpy as np
from jax.experimental import pallas as pl
from jax.experimental.pallas import tpu as pltpu

LN_EPS = 1e-5


def _round_up(a, b):
    return (a + b - 1) // b * b


# ---------------------------------------------------------------------------
# Weight-only preprocessing (plain JAX glue, hoisted out of the forward pass)
# ---------------------------------------------------------------------------
def entmax15(z, axis):
    """Exact entmax-1.5 (Peters & Martins 2019), sort-based algorithm."""
    # TODO(synk): entmax15 is weight-only preprocessing; jnp.sort has no clean
    # Pallas TPU lowering, so it stays in plain JAX outside the kernel.
    z = jnp.moveaxis(z, axis, -1)
    z = z - jnp.max(z, axis=-1, keepdims=True)
    z = z / 2.0
    z_sorted = jnp.flip(jnp.sort(z, axis=-1), axis=-1)          # descending
    k = jnp.arange(1, z.shape[-1] + 1, dtype=z.dtype)
    mean = jnp.cumsum(z_sorted, axis=-1) / k
    mean_sq = jnp.cumsum(z_sorted ** 2, axis=-1) / k
    ss = k * (mean_sq - mean ** 2)
    delta = (1.0 - ss) / k
    delta_nz = jnp.maximum(delta, 0.0)
    tau = mean - jnp.sqrt(delta_nz)
    support = jnp.sum((tau <= z_sorted).astype(jnp.int32), axis=-1, keepdims=True)
    tau_star = jnp.take_along_axis(tau, support - 1, axis=-1)
    p = jnp.maximum(z - tau_star, 0.0) ** 2
    return jnp.moveaxis(p, -1, axis)


def init_params(key, M, N, D, T, L):
    k1, k2, k3 = jax.random.split(key, 3)
    return dict(
        route_weights=jax.random.normal(k1, (M, N, D, T), dtype=jnp.float32),
        thread=jax.random.uniform(k2, (1, M, N), dtype=jnp.float32),
        routing_leaves=jax.random.uniform(k3, (L, T), dtype=jnp.float32),
        ln_gamma=jnp.ones((T,), jnp.float32),
        ln_beta=jnp.zeros((T,), jnp.float32),
    )


def preprocess_params(params, compute_dtype=jnp.float32):
    """Build the constant, VMEM-resident kernel operands once per weight set."""
    M, N, D, T = params["route_weights"].shape
    L = params["routing_leaves"].shape[0]
    NT, NL, MN = N * T, N * L, M * N
    MD, MNT, MNL = M * D, M * N * T, M * N * L
    NT_pad = _round_up(NT, 128)

    f32 = jnp.float32
    eye = lambda n: jnp.eye(n, dtype=f32)

    # entmax'd route weights, block-diagonal over in-capsules m:
    #   W_blk[m*D + d, m*NT + n*T + t] = weights[m, n, d, t]
    weights = entmax15(params["route_weights"].astype(f32), axis=-2)
    w_per_m = jnp.transpose(weights, (0, 2, 1, 3)).reshape(M, D, NT)
    w_blk = jnp.einsum("mdk,mp->mdpk", w_per_m, eye(M)).reshape(MD, MNT)

    # normalized routing leaves, block-diagonal over the fused (m, n) blocks
    lh = params["routing_leaves"].astype(f32)
    lh = lh / jnp.maximum(jnp.linalg.norm(lh, axis=-1, keepdims=True), 1e-12)
    lh_blk = jnp.kron(eye(MN), lh.T)                                   # (MNT, MNL)

    # votes -> (votes - mean over m), folded into one matrix
    cm = eye(MNL) - jnp.kron(jnp.ones((M, M), f32), eye(NL)) / M       # (MNL, MNL)
    # mean over leaves L within each (m, n) block
    rl = jnp.kron(eye(MN), jnp.full((L, 1), 1.0 / L, f32))             # (MNL, MN)
    # softmax-over-m denominator, broadcast back over the m lanes
    sb = jnp.kron(jnp.ones((M, M), f32), eye(N))                       # (MN, MN)
    # prob[b, (m,n)] -> broadcast over the T lanes of that (m,n) block
    ep = jnp.kron(eye(MN), jnp.ones((1, T), f32))                      # (MN, MNT)
    # sum over m, fused with LayerNorm mean-centering over each T block
    c_ln = eye(NT) - jnp.kron(eye(N), jnp.full((T, T), 1.0 / T, f32))
    smc = jnp.tile(eye(NT), (M, 1)) @ c_ln                             # (MNT, NT)
    # per-T-block variance, broadcast back over the T lanes
    vb = jnp.kron(eye(N), jnp.full((T, T), 1.0 / T, f32))              # (NT, NT)

    thr2 = (params["thread"].astype(f32)[0] ** 2).reshape(1, MN)       # (1, MN)

    gamma_t = jnp.tile(params["ln_gamma"].astype(f32), N)              # (NT,)
    beta_t = jnp.tile(params["ln_beta"].astype(f32), N)
    g_pad = jnp.zeros((NT, NT_pad), f32).at[:, :NT].set(jnp.diag(gamma_t))
    b_pad = jnp.zeros((1, NT_pad), f32).at[0, :NT].set(beta_t)

    operands = dict(
        w_blk=w_blk.astype(compute_dtype),
        lh_blk=lh_blk, cm=cm, rl=rl, thr2=thr2, sb=sb, ep=ep, smc=smc,
        vb=vb, g_pad=g_pad, b_pad=b_pad,
    )
    dims = dict(M=M, N=N, D=D, T=T, L=L, NT_pad=NT_pad,
                compute_dtype=compute_dtype)
    return dict(operands=operands, dims=dims)


# ---------------------------------------------------------------------------
# Pallas kernel: one grid step = one TB-row batch tile, all capsules, 2-D only
# ---------------------------------------------------------------------------
def infer_capsule_kernel(x_ref, w_ref, lh_ref, cm_ref, rl_ref, thr2_ref,
                         sb_ref, ep_ref, smc_ref, vb_ref, gpad_ref, bpad_ref,
                         out_ref):
    # x_ref:    (TB, M*D)       batch tile, lane axis = m*D + d
    # w_ref:    (M*D, M*N*T)    block-diagonal entmax'd route weights
    # lh_ref:   (M*N*T, M*N*L)  block-diagonal normalized leaves^T
    # cm_ref:   (MNL, MNL)      I - (mean over m, broadcast back)
    # rl_ref:   (MNL, M*N)      mean over leaves L per (m, n) block
    # thr2_ref: (1, M*N)        thread**2
    # sb_ref:   (M*N, M*N)      sum over m, broadcast back over m lanes
    # ep_ref:   (M*N, M*N*T)    per-(m,n) scalar -> its T lanes
    # smc_ref:  (M*N*T, N*T)    sum over m fused with LN mean-centering
    # vb_ref:   (N*T, N*T)      per-T-block variance broadcast
    # gpad_ref: (N*T, NT_pad)   diag(gamma tiled over n), zero pad lanes
    # bpad_ref: (1, NT_pad)     beta tiled over n, zero pad lanes
    # out_ref:  (TB, NT_pad)    lane-dense output slab
    f32 = jnp.float32

    # priors[b, m*NT + n*T + t] = sum_d x[b,m,d] * weights[m,n,d,t]  (one MXU pass)
    priors = jnp.dot(x_ref[...], w_ref[...], preferred_element_type=f32)

    # votes[b, m*NL + n*L + l] = sigmoid(priors . leave_hash^T)   (lane-dense EUP)
    votes = jax.nn.sigmoid(
        jnp.dot(priors, lh_ref[...], preferred_element_type=f32))

    # js_similarity: (votes - mean over in-capsules m), then mean over leaves
    diff = jnp.dot(votes, cm_ref[...], preferred_element_type=f32)
    dis = jnp.dot(diff * diff, rl_ref[...], preferred_element_type=f32)  # (TB, MN)

    # routing weight + softmax over the in-capsule axis m (kept fused in lanes)
    weight = jnp.maximum(thr2_ref[...] - dis, 0.0)                       # (TB, MN)
    wmax = jnp.max(weight, axis=-1, keepdims=True)    # per-row shift: constant
    e = jnp.exp(weight - wmax)                        # across m for each n => OK
    denom = jnp.dot(e, sb_ref[...], preferred_element_type=f32)
    prob = e * pl.reciprocal(denom, approx=False)                        # (TB, MN)

    # next_caps = sum_m prob * priors, fused with LayerNorm mean-centering
    prob_exp = jnp.dot(prob, ep_ref[...], preferred_element_type=f32)    # (TB, MNT)
    centered = jnp.dot(prob_exp * priors, smc_ref[...],
                       preferred_element_type=f32)                       # (TB, NT)

    # LayerNorm: per-T-block variance (broadcast via matmul), scale, affine+pad
    var = jnp.dot(centered * centered, vb_ref[...], preferred_element_type=f32)
    normed = centered * jax.lax.rsqrt(var + LN_EPS)
    out_ref[...] = (jnp.dot(normed, gpad_ref[...], preferred_element_type=f32)
                    + bpad_ref[...]).astype(out_ref.dtype)


# ---------------------------------------------------------------------------
# Wrapper
# ---------------------------------------------------------------------------
def _choose_batch_tile(B, per_row_bytes, budget_bytes=16 * 1024 * 1024, cap=512):
    tb = budget_bytes // max(per_row_bytes, 1)
    tb = max(8, min(cap, (tb // 8) * 8))
    tb = min(tb, _round_up(B, 8))
    # keep >= 2 grid steps so the "parallel" batch axis shards over 2 TCs (v7x)
    if pl.cdiv(B, tb) < 2:
        tb = max(8, _round_up(pl.cdiv(B, 2), 8))
    return tb


def infer_capsule_apply(x, prepared, batch_tile=None):
    ops, dims = prepared["operands"], prepared["dims"]
    M, N, D, T, L = dims["M"], dims["N"], dims["D"], dims["T"], dims["L"]
    NT, NL, MN = N * T, N * L, M * N
    MD, MNT, MNL = M * D, M * N * T, M * N * L
    NT_pad = dims["NT_pad"]
    cdt = dims["compute_dtype"]

    B = x.shape[0]
    assert x.shape == (B, M, D)

    # lane-dense 2-D x tile: (B, M*D); pure reshape, no transpose needed
    x2 = x.reshape(B, MD).astype(cdt)

    # batch tile from a VMEM budget (multiple of 8, <= 512), >= 2 grid steps
    x_item = jnp.dtype(cdt).itemsize
    per_row_bytes = (2 * x_item * MD                                  # x (dbl-buf)
                     + 4 * (3 * MNT + 3 * MNL + 4 * MN + 4 * NT)      # f32 temps
                     + 2 * 4 * NT_pad)                                # out (dbl-buf)
    TB = batch_tile if batch_tile is not None else _choose_batch_tile(B, per_row_bytes)
    assert TB % 8 == 0, "batch_tile must be a multiple of 8 (sublane alignment)"
    num_steps = max(2, pl.cdiv(B, TB))
    B_pad = TB * num_steps
    if B_pad != B:
        x2 = jnp.pad(x2, ((0, B_pad - B), (0, 0)))

    const_list = [ops["w_blk"], ops["lh_blk"], ops["cm"], ops["rl"], ops["thr2"],
                  ops["sb"], ops["ep"], ops["smc"], ops["vb"], ops["g_pad"],
                  ops["b_pad"]]
    const_bytes = sum(int(np.prod(a.shape)) * a.dtype.itemsize for a in const_list)
    flops = 2 * B_pad * (MD * MNT + MNT * MNL + MNL * MNL + MNL * MN
                         + MN * MN + MN * MNT + MNT * NT + NT * NT + NT * NT_pad)
    transcendentals = B_pad * (MNL + 2 * MN + NT)
    bytes_accessed = B_pad * MD * x_item + B_pad * NT_pad * 4 + const_bytes

    resident = lambda shape: pl.BlockSpec(shape, lambda b: (0, 0))

    out = pl.pallas_call(
        infer_capsule_kernel,
        out_shape=jax.ShapeDtypeStruct((B_pad, NT_pad), jnp.float32),
        grid_spec=pltpu.PrefetchScalarGridSpec(
            num_scalar_prefetch=0,
            grid=(num_steps,),
            in_specs=[
                # NOTE: pipeline_mode=pl.Buffered(3) on the x spec is an option
                # if profiling shows the x DMA exposed at large TB.
                pl.BlockSpec((TB, MD), lambda b: (b, 0)),     # x (per-step DMA)
                resident((MD, MNT)),                          # block-diag weights
                resident((MNT, MNL)),                         # block-diag leaves^T
                resident((MNL, MNL)),                         # I - mean-over-m
                resident((MNL, MN)),                          # mean over L
                resident((1, MN)),                            # thread**2
                resident((MN, MN)),                           # softmax denom bcast
                resident((MN, MNT)),                          # prob -> T lanes
                resident((MNT, NT)),                          # sum-m + LN center
                resident((NT, NT)),                           # variance bcast
                resident((NT, NT_pad)),                       # gamma (padded)
                resident((1, NT_pad)),                        # beta (padded)
            ],
            out_specs=pl.BlockSpec((TB, NT_pad), lambda b: (b, 0)),
        ),
        compiler_params=pltpu.CompilerParams(
            dimension_semantics=("parallel",),
            vmem_limit_bytes=32 * 1024 * 1024),
        cost_estimate=pl.CostEstimate(flops=flops,
                                      transcendentals=transcendentals,
                                      bytes_accessed=bytes_accessed),
    )(x2, *const_list)

    return out[:B, :NT].reshape(B, N, T)


def infer_capsule_forward(x, params, compute_dtype=jnp.float32, batch_tile=None):
    return infer_capsule_apply(x, preprocess_params(params, compute_dtype),
                               batch_tile=batch_tile)


# ---------------------------------------------------------------------------
# Pure-JAX reference (mirrors the PyTorch module) for a sanity check
# ---------------------------------------------------------------------------
def reference_forward(x, params):
    weights = entmax15(params["route_weights"], axis=-2)
    priors = jnp.einsum("bmd,mndt->bmnt", x, weights)
    lh = params["routing_leaves"]
    lh = lh / jnp.maximum(jnp.linalg.norm(lh, axis=-1, keepdims=True), 1e-12)
    votes = jax.nn.sigmoid(jnp.einsum("ld,bmnd->bmnl", lh, priors))
    mean_cap = jnp.mean(votes, axis=1, keepdims=True)
    dis = jnp.mean((votes - mean_cap) ** 2, axis=-1)
    weight = jax.nn.relu(params["thread"] ** 2 - dis)
    prob = jax.nn.softmax(weight, axis=-2)
    next_caps = jnp.sum(prob[..., None] * priors, axis=1)
    mu = jnp.mean(next_caps, axis=-1, keepdims=True)
    var = jnp.mean((next_caps - mu) ** 2, axis=-1, keepdims=True)
    normed = (next_caps - mu) / jnp.sqrt(var + LN_EPS)
    return normed * params["ln_gamma"] + params["ln_beta"]


if __name__ == "__main__":
    # small, forward-consistent shapes
    B, M, N, D, T, L = 2, 8, 4, 16, 8, 16   # batch, in_caps, out_caps, in_sz, out_sz, leaves

    key = jax.random.PRNGKey(0)
    kx, kp = jax.random.split(key)
    x = jax.random.normal(kx, (B, M, D), dtype=jnp.float32)
    params = init_params(kp, M, N, D, T, L)

    ref = jax.block_until_ready(reference_forward(x, params))

    # f32 matmul-input path: tight tolerance
    prep_f32 = preprocess_params(params, compute_dtype=jnp.float32)
    fwd_f32 = jax.jit(functools.partial(infer_capsule_apply, prepared=prep_f32))
    out_f32 = jax.block_until_ready(fwd_f32(x))
    np.testing.assert_allclose(np.asarray(out_f32), np.asarray(ref),
                               rtol=2e-3, atol=2e-3)

    # bf16 matmul-input path (DMA + MXU win on v6e/v7x): looser tolerance
    prep_bf16 = preprocess_params(params, compute_dtype=jnp.bfloat16)
    fwd_bf16 = jax.jit(functools.partial(infer_capsule_apply, prepared=prep_bf16))
    out_bf16 = jax.block_until_ready(fwd_bf16(x))
    np.testing.assert_allclose(np.asarray(out_bf16), np.asarray(ref),
                               rtol=5e-2, atol=5e-2)

    print("KERNEL_OK")
</pallas_src>

<mosaic_0001>
module attributes {stable_mosaic.version = 11 : i64} {
  func.func @infer_capsule_kernel(%arg0: i32, %arg1: memref<8x128xf32, #tpu.memory_space<vmem>>, %arg2: memref<128x256xf32, #tpu.memory_space<vmem>>, %arg3: memref<256x512xf32, #tpu.memory_space<vmem>>, %arg4: memref<512x512xf32, #tpu.memory_space<vmem>>, %arg5: memref<512x32xf32, #tpu.memory_space<vmem>>, %arg6: memref<1x32xf32, #tpu.memory_space<vmem>>, %arg7: memref<32x32xf32, #tpu.memory_space<vmem>>, %arg8: memref<32x256xf32, #tpu.memory_space<vmem>>, %arg9: memref<256x32xf32, #tpu.memory_space<vmem>>, %arg10: memref<32x32xf32, #tpu.memory_space<vmem>>, %arg11: memref<32x128xf32, #tpu.memory_space<vmem>>, %arg12: memref<1x128xf32, #tpu.memory_space<vmem>>, %arg13: memref<8x128xf32, #tpu.memory_space<vmem>>) attributes {dimension_semantics = [#tpu.dimension_semantics<parallel>], iteration_bounds = array<i64: 2>, scalar_prefetch = 0 : i64, scratch_operands = 0 : i64, tpu.core_type = #tpu.core_type<tc>, window_params = [{transform_indices = @transform_0, window_bounds = array<i64: 8, 128>}, {pipeline_mode = #tpu.pipeline_mode<synchronous>, transform_indices = @transform_1, window_bounds = array<i64: 128, 256>}, {pipeline_mode = #tpu.pipeline_mode<synchronous>, transform_indices = @transform_2, window_bounds = array<i64: 256, 512>}, {pipeline_mode = #tpu.pipeline_mode<synchronous>, transform_indices = @transform_3, window_bounds = array<i64: 512, 512>}, {pipeline_mode = #tpu.pipeline_mode<synchronous>, transform_indices = @transform_4, window_bounds = array<i64: 512, 32>}, {pipeline_mode = #tpu.pipeline_mode<synchronous>, transform_indices = @transform_5, window_bounds = array<i64: 1, 32>}, {pipeline_mode = #tpu.pipeline_mode<synchronous>, transform_indices = @transform_6, window_bounds = array<i64: 32, 32>}, {pipeline_mode = #tpu.pipeline_mode<synchronous>, transform_indices = @transform_7, window_bounds = array<i64: 32, 256>}, {pipeline_mode = #tpu.pipeline_mode<synchronous>, transform_indices = @transform_8, window_bounds = array<i64: 256, 32>}, {pipeline_mode = #tpu.pipeline_mode<synchronous>, transform_indices = @transform_9, window_bounds = array<i64: 32, 32>}, {pipeline_mode = #tpu.pipeline_mode<synchronous>, transform_indices = @transform_10, window_bounds = array<i64: 32, 128>}, {pipeline_mode = #tpu.pipeline_mode<synchronous>, transform_indices = @transform_11, window_bounds = array<i64: 1, 128>}, {transform_indices = @transform_12, window_bounds = array<i64: 8, 128>}]} {
    %c0 = arith.constant 0 : index
    %c0_0 = arith.constant 0 : index
    %0 = vector.load %arg1[%c0, %c0_0] : memref<8x128xf32, #tpu.memory_space<vmem>>, vector<8x128xf32>
    %c0_1 = arith.constant 0 : index
    %c0_2 = arith.constant 0 : index
    %1 = vector.load %arg2[%c0_1, %c0_2] : memref<128x256xf32, #tpu.memory_space<vmem>>, vector<128x256xf32>
    %cst = arith.constant dense<0.000000e+00> : vector<8x256xf32>
    %2 = tpu.matmul %0, %1, %cst {dimension_numbers = #tpu.dot_dimension_numbers<[1], [0], [0], [1], [0, 0, 1, 1], [], []>} : vector<8x128xf32>, vector<128x256xf32>, vector<8x256xf32> -> vector<8x256xf32>
    %c0_3 = arith.constant 0 : index
    %c0_4 = arith.constant 0 : index
    %3 = vector.load %arg3[%c0_3, %c0_4] : memref<256x512xf32, #tpu.memory_space<vmem>>, vector<256x512xf32>
    %cst_5 = arith.constant dense<0.000000e+00> : vector<8x512xf32>
    %4 = tpu.matmul %2, %3, %cst_5 {dimension_numbers = #tpu.dot_dimension_numbers<[1], [0], [0], [1], [0, 0, 1, 1], [], []>} : vector<8x256xf32>, vector<256x512xf32>, vector<8x512xf32> -> vector<8x512xf32>
    %5 = arith.negf %4 : vector<8x512xf32>
    %6 = math.exp %5 : vector<8x512xf32>
    %cst_6 = arith.constant 1.000000e+00 : f32
    %7 = vector.broadcast %cst_6 : f32 to vector<8x512xf32>
    %8 = arith.addf %7, %6 : vector<8x512xf32>
    %9 = arith.divf %7, %8 : vector<8x512xf32>
    %c0_7 = arith.constant 0 : index
    %c0_8 = arith.constant 0 : index
    %10 = vector.load %arg4[%c0_7, %c0_8] : memref<512x512xf32, #tpu.memory_space<vmem>>, vector<512x512xf32>
    %cst_9 = arith.constant dense<0.000000e+00> : vector<8x512xf32>
    %11 = tpu.matmul %9, %10, %cst_9 {dimension_numbers = #tpu.dot_dimension_numbers<[1], [0], [0], [1], [0, 0, 1, 1], [], []>} : vector<8x512xf32>, vector<512x512xf32>, vector<8x512xf32> -> vector<8x512xf32>
    %12 = arith.mulf %11, %11 : vector<8x512xf32>
    %c0_10 = arith.constant 0 : index
    %c0_11 = arith.constant 0 : index
    %13 = vector.load %arg5[%c0_10, %c0_11] : memref<512x32xf32, #tpu.memory_space<vmem>>, vector<512x32xf32>
    %cst_12 = arith.constant dense<0.000000e+00> : vector<8x32xf32>
    %14 = tpu.matmul %12, %13, %cst_12 {dimension_numbers = #tpu.dot_dimension_numbers<[1], [0], [0], [1], [0, 0, 1, 1], [], []>} : vector<8x512xf32>, vector<512x32xf32>, vector<8x32xf32> -> vector<8x32xf32>
    %c0_13 = arith.constant 0 : index
    %c0_14 = arith.constant 0 : index
    %15 = vector.load %arg6[%c0_13, %c0_14] : memref<1x32xf32, #tpu.memory_space<vmem>>, vector<1x32xf32>
    %16 = vector.broadcast %15 : vector<1x32xf32> to vector<8x32xf32>
    %17 = arith.subf %16, %14 : vector<8x32xf32>
    %cst_15 = arith.constant 0.000000e+00 : f32
    %18 = vector.broadcast %cst_15 : f32 to vector<8x32xf32>
    %19 = arith.maximumf %17, %18 : vector<8x32xf32>
    %cst_16 = arith.constant dense<0xFF800000> : vector<8xf32>
    %20 = vector.multi_reduction <maximumf>, %19, %cst_16 [1] : vector<8x32xf32> to vector<8xf32>
    %21 = vector.shape_cast %20 : vector<8xf32> to vector<8x1xf32>
    %22 = vector.broadcast %21 : vector<8x1xf32> to vector<8x32xf32>
    %23 = arith.subf %19, %22 : vector<8x32xf32>
    %24 = math.exp %23 : vector<8x32xf32>
    %c0_17 = arith.constant 0 : index
    %c0_18 = arith.constant 0 : index
    %25 = vector.load %arg7[%c0_17, %c0_18] : memref<32x32xf32, #tpu.memory_space<vmem>>, vector<32x32xf32>
    %cst_19 = arith.constant dense<0.000000e+00> : vector<8x32xf32>
    %26 = tpu.matmul %24, %25, %cst_19 {dimension_numbers = #tpu.dot_dimension_numbers<[1], [0], [0], [1], [0, 0, 1, 1], [], []>} : vector<8x32xf32>, vector<32x32xf32>, vector<8x32xf32> -> vector<8x32xf32>
    %27 = tpu.reciprocal %26 : vector<8x32xf32> -> vector<8x32xf32>
    %28 = arith.mulf %24, %27 : vector<8x32xf32>
    %c0_20 = arith.constant 0 : index
    %c0_21 = arith.constant 0 : index
    %29 = vector.load %arg8[%c0_20, %c0_21] : memref<32x256xf32, #tpu.memory_space<vmem>>, vector<32x256xf32>
    %cst_22 = arith.constant dense<0.000000e+00> : vector<8x256xf32>
    %30 = tpu.matmul %28, %29, %cst_22 {dimension_numbers = #tpu.dot_dimension_numbers<[1], [0], [0], [1], [0, 0, 1, 1], [], []>} : vector<8x32xf32>, vector<32x256xf32>, vector<8x256xf32> -> vector<8x256xf32>
    %31 = arith.mulf %30, %2 : vector<8x256xf32>
    %c0_23 = arith.constant 0 : index
    %c0_24 = arith.constant 0 : index
    %32 = vector.load %arg9[%c0_23, %c0_24] : memref<256x32xf32, #tpu.memory_space<vmem>>, vector<256x32xf32>
    %cst_25 = arith.constant dense<0.000000e+00> : vector<8x32xf32>
    %33 = tpu.matmul %31, %32, %cst_25 {dimension_numbers = #tpu.dot_dimension_numbers<[1], [0], [0], [1], [0, 0, 1, 1], [], []>} : vector<8x256xf32>, vector<256x32xf32>, vector<8x32xf32> -> vector<8x32xf32>
    %34 = arith.mulf %33, %33 : vector<8x32xf32>
    %c0_26 = arith.constant 0 : index
    %c0_27 = arith.constant 0 : index
    %35 = vector.load %arg10[%c0_26, %c0_27] : memref<32x32xf32, #tpu.memory_space<vmem>>, vector<32x32xf32>
    %cst_28 = arith.constant dense<0.000000e+00> : vector<8x32xf32>
    %36 = tpu.matmul %34, %35, %cst_28 {dimension_numbers = #tpu.dot_dimension_numbers<[1], [0], [0], [1], [0, 0, 1, 1], [], []>} : vector<8x32xf32>, vector<32x32xf32>, vector<8x32xf32> -> vector<8x32xf32>
    %cst_29 = arith.constant 9.99999974E-6 : f32
    %37 = vector.broadcast %cst_29 : f32 to vector<8x32xf32>
    %38 = arith.addf %36, %37 : vector<8x32xf32>
    %39 = math.rsqrt %38 : vector<8x32xf32>
    %40 = arith.mulf %33, %39 : vector<8x32xf32>
    %c0_30 = arith.constant 0 : index
    %c0_31 = arith.constant 0 : index
    %41 = vector.load %arg11[%c0_30, %c0_31] : memref<32x128xf32, #tpu.memory_space<vmem>>, vector<32x128xf32>
    %cst_32 = arith.constant dense<0.000000e+00> : vector<8x128xf32>
    %42 = tpu.matmul %40, %41, %cst_32 {dimension_numbers = #tpu.dot_dimension_numbers<[1], [0], [0], [1], [0, 0, 1, 1], [], []>} : vector<8x32xf32>, vector<32x128xf32>, vector<8x128xf32> -> vector<8x128xf32>
    %c0_33 = arith.constant 0 : index
    %c0_34 = arith.constant 0 : index
    %43 = vector.load %arg12[%c0_33, %c0_34] : memref<1x128xf32, #tpu.memory_space<vmem>>, vector<1x128xf32>
    %44 = vector.broadcast %43 : vector<1x128xf32> to vector<8x128xf32>
    %45 = arith.addf %42, %44 : vector<8x128xf32>
    %c0_35 = arith.constant 0 : index
    %c0_36 = arith.constant 0 : index
    %46 = vector.load %arg13[%c0_35, %c0_36] : memref<8x128xf32, #tpu.memory_space<vmem>>, vector<8x128xf32>
    tpu.vector_store %arg13[%c0_35, %c0_36], %45 {strides = array<i32>} : memref<8x128xf32, #tpu.memory_space<vmem>>, vector<8x128xf32>,
    return
  }
  func.func @transform_0(%arg0: i32) -> (i32, i32) {
    %c0_i32 = arith.constant 0 : i32
    %c0_i32_0 = arith.constant 0 : i32
    return %arg0, %c0_i32 : i32, i32
  }
  func.func @transform_1(%arg0: i32) -> (i32, i32) {
    %c0_i32 = arith.constant 0 : i32
    %c0_i32_0 = arith.constant 0 : i32
    %c0_i32_1 = arith.constant 0 : i32
    return %c0_i32, %c0_i32_0 : i32, i32
  }
  func.func @transform_2(%arg0: i32) -> (i32, i32) {
    %c0_i32 = arith.constant 0 : i32
    %c0_i32_0 = arith.constant 0 : i32
    %c0_i32_1 = arith.constant 0 : i32
    return %c0_i32, %c0_i32_0 : i32, i32
  }
  func.func @transform_3(%arg0: i32) -> (i32, i32) {
    %c0_i32 = arith.constant 0 : i32
    %c0_i32_0 = arith.constant 0 : i32
    %c0_i32_1 = arith.constant 0 : i32
    return %c0_i32, %c0_i32_0 : i32, i32
  }
  func.func @transform_4(%arg0: i32) -> (i32, i32) {
    %c0_i32 = arith.constant 0 : i32
    %c0_i32_0 = arith.constant 0 : i32
    %c0_i32_1 = arith.constant 0 : i32
    return %c0_i32, %c0_i32_0 : i32, i32
  }
  func.func @transform_5(%arg0: i32) -> (i32, i32) {
    %c0_i32 = arith.constant 0 : i32
    %c0_i32_0 = arith.constant 0 : i32
    %c0_i32_1 = arith.constant 0 : i32
    return %c0_i32, %c0_i32_0 : i32, i32
  }
  func.func @transform_6(%arg0: i32) -> (i32, i32) {
    %c0_i32 = arith.constant 0 : i32
    %c0_i32_0 = arith.constant 0 : i32
    %c0_i32_1 = arith.constant 0 : i32
    return %c0_i32, %c0_i32_0 : i32, i32
  }
  func.func @transform_7(%arg0: i32) -> (i32, i32) {
    %c0_i32 = arith.constant 0 : i32
    %c0_i32_0 = arith.constant 0 : i32
    %c0_i32_1 = arith.constant 0 : i32
    return %c0_i32, %c0_i32_0 : i32, i32
  }
  func.func @transform_8(%arg0: i32) -> (i32, i32) {
    %c0_i32 = arith.constant 0 : i32
    %c0_i32_0 = arith.constant 0 : i32
    %c0_i32_1 = arith.constant 0 : i32
    return %c0_i32, %c0_i32_0 : i32, i32
  }
  func.func @transform_9(%arg0: i32) -> (i32, i32) {
    %c0_i32 = arith.constant 0 : i32
    %c0_i32_0 = arith.constant 0 : i32
    %c0_i32_1 = arith.constant 0 : i32
    return %c0_i32, %c0_i32_0 : i32, i32
  }
  func.func @transform_10(%arg0: i32) -> (i32, i32) {
    %c0_i32 = arith.constant 0 : i32
    %c0_i32_0 = arith.constant 0 : i32
    %c0_i32_1 = arith.constant 0 : i32
    return %c0_i32, %c0_i32_0 : i32, i32
  }
  func.func @transform_11(%arg0: i32) -> (i32, i32) {
    %c0_i32 = arith.constant 0 : i32
    %c0_i32_0 = arith.constant 0 : i32
    %c0_i32_1 = arith.constant 0 : i32
    return %c0_i32, %c0_i32_0 : i32, i32
  }
  func.func @transform_12(%arg0: i32) -> (i32, i32) {
    %c0_i32 = arith.constant 0 : i32
    %c0_i32_0 = arith.constant 0 : i32
    return %arg0, %c0_i32 : i32, i32
  }
}

</mosaic_0001>

<llo_original>
// kernel: infer_capsule_apply.1
$region0: #{infer_capsule_apply.1}
  #allocation0 [shape = 'u32[]', space=smem, size = 0x4, offset = 0x4, fixed_abs, tag = 'smem constant byte address 0x4 - core index']
  #allocation1 [shape = 'u32[144,128]{1,0:T(1,128)}', space=vmem, size = 0x12000, scoped, tag = 'internal scratch']
  %s0 = inlined_call_operand.vmem [shape: f32[16,128], index: 0, kind: input, shape index: {}]
  %s1 = inlined_call_operand.hbm [shape: f32[128,256], index: 1, kind: input, shape index: {}]
  %s2 = inlined_call_operand.hbm [shape: f32[256,512], index: 2, kind: input, shape index: {}]
  %s3 = inlined_call_operand.hbm [shape: f32[512,512], index: 3, kind: input, shape index: {}]
  %s4 = inlined_call_operand.hbm [shape: f32[512,32], index: 4, kind: input, shape index: {}]
  %s5 = inlined_call_operand.vmem [shape: f32[1,32], index: 5, kind: input, shape index: {}]
  %s6 = inlined_call_operand.hbm [shape: f32[32,32], index: 6, kind: input, shape index: {}]
  %s7 = inlined_call_operand.vmem [shape: f32[32,256], index: 7, kind: input, shape index: {}]
  %s8 = inlined_call_operand.hbm [shape: f32[256,32], index: 8, kind: input, shape index: {}]
  %s9 = inlined_call_operand.hbm [shape: f32[32,32], index: 9, kind: input, shape index: {}]
  %s10 = inlined_call_operand.hbm [shape: f32[32,128], index: 10, kind: input, shape index: {}]
  %s11 = inlined_call_operand.vmem [shape: f32[1,128], index: 11, kind: input, shape index: {}]
  %s12 = inlined_call_operand.vmem [shape: f32[16,128], index: 12, kind: output, shape index: {}]
  %s13 = sld [smem:[#allocation0]]
  $region113: #{infer_capsule_apply.1} parent=0
    _
  %s15 = ssub.s32 1, %s13
  %s16 = scalar_select 0, %s15, %s13
  $region1: #{infer_capsule_apply.1} parent=0
    #allocation2 [shape = 'u8[131072]{0}', space=vmem, size = 0x20000, scoped, tag = 'input window, operand 1, single buffered']
    #allocation3 [shape = 's32[2]{0}', space=sflag, size = 0x8, scoped, tag = 'scoped memory for infer_capsule_apply.1']
    #allocation4 [shape = 'u8[524288]{0}', space=vmem, size = 0x80000, scoped, tag = 'input window, operand 2, single buffered']
    #allocation5 [shape = 's32[1]{0}', space=sflag, size = 0x4, scoped, tag = 'scoped memory for infer_capsule_apply.1']
    #allocation6 [shape = 'u8[1048576]{0}', space=vmem, size = 0x100000, scoped, tag = 'input window, operand 3, single buffered']
    #allocation7 [shape = 'u8[262144]{0}', space=vmem, size = 0x40000, scoped, tag = 'input window, operand 4, single buffered']
    #allocation8 [shape = 's32[1]{0}', space=sflag, size = 0x4, scoped, tag = 'scoped memory for infer_capsule_apply.1']
    #allocation9 [shape = 'u8[16384]{0}', space=vmem, size = 0x4000, scoped, tag = 'input window, operand 6, single buffered']
    #allocation10 [shape = 'u8[131072]{0}', space=vmem, size = 0x20000, scoped, tag = 'input window, operand 8, single buffered']
    #allocation11 [shape = 's32[1]{0}', space=sflag, size = 0x4, scoped, tag = 'scoped memory for infer_capsule_apply.1']
    #allocation12 [shape = 'u8[16384]{0}', space=vmem, size = 0x4000, scoped, tag = 'input window, operand 9, single buffered']
    #allocation13 [shape = 'u8[16384]{0}', space=vmem, size = 0x4000, scoped, tag = 'input window, operand 10, single buffered']
    #allocation14 [shape = 's32[1]{0}', space=sflag, size = 0x4, scoped, tag = 'scoped memory for infer_capsule_apply.1']
    %17 = vsyncpa [#allocation3], 0
    %18 = vsyncpa [#allocation5], 0
    %19 = vsyncpa [#allocation8], 0
    %20 = vsyncpa [#allocation11], 0
    %21 = vsyncpa [#allocation14], 0
    loop: start=0, step=1, limit=4
    $region2: #{infer_capsule_apply.1} parent=1 // loop_pre_header
      _
    $region3: #{infer_capsule_apply.1} parent=1 // loop_header
      %s23 = sphi 0, %s27
      %p24 = scmp.ge.s32.totalorder %s23, 4
      %s33 = sphi 0, %s35
      %s36 = sphi 0, %s33
      %s37 = sphi 0, %s36
      %s53 = sphi 0, %s37
      %s57 = sphi 0, %s57
      %s59 = sphi 0, %s57
      %s60 = sphi 0, %s59
      %s74 = sphi 0, %s60
      %s78 = sphi 0, %s78
      %s80 = sphi 0, %s78
      %s81 = sphi 0, %s80
      %s95 = sphi 0, %s81
      %s99 = sphi 0, %s99
      %s101 = sphi 0, %s99
      %s102 = sphi 0, %s101
      %s116 = sphi 0, %s102
      %s120 = sphi 0, %s120
      %s122 = sphi 0, %s120
      %s123 = sphi 0, %s122
      %s137 = sphi 0, %s123
      %s141 = sphi 0, %s141
      %s143 = sphi 0, %s141
      %s144 = sphi 0, %s143
      %s158 = sphi 0, %s144
      %s162 = sphi 0, %s162
      %s164 = sphi 0, %s162
      %s165 = sphi 0, %s164
      %s179 = sphi 0, %s165
      %s183 = sphi 0, %s183
      %s185 = sphi 0, %s183
      %s186 = sphi 0, %s185
      %s200 = sphi 0, %s186
      %s204 = sphi 0, %s204
      %s206 = sphi 0, %s204
      %s207 = sphi 0, %s206
      %s221 = sphi 0, %s207
      %s225 = sphi 0, %s225
      %s227 = sphi 0, %s225
      %s228 = sphi 0, %s227
      %s242 = sphi 0, %s228
      %s246 = sphi 0, %s246
      %s248 = sphi 0, %s246
      %s249 = sphi 0, %s248
      %s263 = sphi 0, %s249
      %s267 = sphi 0, %s267
      %s269 = sphi 0, %s267
      %s270 = sphi 0, %s269
      %s284 = sphi 0, %s270
      %s290 = sphi 0, %s292
      %s293 = sphi 0, %s290
      %s294 = sphi 0, %s293
      %s310 = sphi 0, %s294
    $region4: #{infer_capsule_apply.1} parent=1 // loop_header_branch
      %26 = sbr.rel (%p24) target = $region8
    $region5: #{infer_capsule_apply.1} parent=1 // loop_body
      %s28 = ssub.s32 %s23, 1
      %s29 = ssub.s32 %s23, 2
      %s30 = sadd.s32 %s23, 1
      %s31 = ssub.s32 %s23, %s30
      %p32 = scmp.eq.s32.totalorder %s31, 0
      %s34 = sadd.s32 %s33, 1
      %s35 = scalar_select %p32, %s33, %s34
      %p38 = pneg %p32
      %p39 = scmp.eq.s32.totalorder %s23, 1
      %p40 = por %p38, %p39
      %p41 = scmp.ne.s32.totalorder %s33, %s36
      %p42 = scmp.eq.s32.totalorder %s23, 0
      %p43 = por %p41, %p42
      %p44 = scmp.ne.s32.totalorder %s33, %s36
      %p45 = scmp.eq.s32.totalorder %s28, 1
      %p46 = por %p44, %p45
      %p47 = scmp.ne.s32.totalorder %s36, %s37
      %p48 = scmp.eq.s32.totalorder %s28, 0
      %p49 = por %p47, %p48
      %p50 = scmp.ne.s32.totalorder %s36, %s37
      %p51 = scmp.eq.s32.totalorder %s29, 1
      %p52 = por %p50, %p51
      %p54 = scmp.ne.s32.totalorder %s37, %s53
      %p55 = scmp.eq.s32.totalorder %s29, 0
      %p56 = por %p54, %p55
      %s58 = sadd.s32 %s57, 1
      %p61 = scmp.eq.s32.totalorder %s23, 1
      %p62 = scmp.ne.s32.totalorder %s57, %s59
      %p63 = scmp.eq.s32.totalorder %s23, 0
      %p64 = por %p62, %p63
      %p65 = scmp.ne.s32.totalorder %s57, %s59
      %p66 = scmp.eq.s32.totalorder %s28, 1
      %p67 = por %p65, %p66
      %p68 = scmp.ne.s32.totalorder %s59, %s60
      %p69 = scmp.eq.s32.totalorder %s28, 0
      %p70 = por %p68, %p69
      %p71 = scmp.ne.s32.totalorder %s59, %s60
      %p72 = scmp.eq.s32.totalorder %s29, 1
      %p73 = por %p71, %p72
      %p75 = scmp.ne.s32.totalorder %s60, %s74
      %p76 = scmp.eq.s32.totalorder %s29, 0
      %p77 = por %p75, %p76
      %s79 = sadd.s32 %s78, 1
      %p82 = scmp.eq.s32.totalorder %s23, 1
      %p83 = scmp.ne.s32.totalorder %s78, %s80
      %p84 = scmp.eq.s32.totalorder %s23, 0
      %p85 = por %p83, %p84
      %p86 = scmp.ne.s32.totalorder %s78, %s80
      %p87 = scmp.eq.s32.totalorder %s28, 1
      %p88 = por %p86, %p87
      %p89 = scmp.ne.s32.totalorder %s80, %s81
      %p90 = scmp.eq.s32.totalorder %s28, 0
      %p91 = por %p89, %p90
      %p92 = scmp.ne.s32.totalorder %s80, %s81
      %p93 = scmp.eq.s32.totalorder %s29, 1
      %p94 = por %p92, %p93
      %p96 = scmp.ne.s32.totalorder %s81, %s95
      %p97 = scmp.eq.s32.totalorder %s29, 0
      %p98 = por %p96, %p97
      %s100 = sadd.s32 %s99, 1
      %p103 = scmp.eq.s32.totalorder %s23, 1
      %p104 = scmp.ne.s32.totalorder %s99, %s101
      %p105 = scmp.eq.s32.totalorder %s23, 0
      %p106 = por %p104, %p105
      %p107 = scmp.ne.s32.totalorder %s99, %s101
      %p108 = scmp.eq.s32.totalorder %s28, 1
      %p109 = por %p107, %p108
      %p110 = scmp.ne.s32.totalorder %s101, %s102
      %p111 = scmp.eq.s32.totalorder %s28, 0
      %p112 = por %p110, %p111
      %p113 = scmp.ne.s32.totalorder %s101, %s102
      %p114 = scmp.eq.s32.totalorder %s29, 1
      %p115 = por %p113, %p114
      %p117 = scmp.ne.s32.totalorder %s102, %s116
      %p118 = scmp.eq.s32.totalorder %s29, 0
      %p119 = por %p117, %p118
      %s121 = sadd.s32 %s120, 1
      %p124 = scmp.eq.s32.totalorder %s23, 1
      %p125 = scmp.ne.s32.totalorder %s120, %s122
      %p126 = scmp.eq.s32.totalorder %s23, 0
      %p127 = por %p125, %p126
      %p128 = scmp.ne.s32.totalorder %s120, %s122
      %p129 = scmp.eq.s32.totalorder %s28, 1
      %p130 = por %p128, %p129
      %p131 = scmp.ne.s32.totalorder %s122, %s123
      %p132 = scmp.eq.s32.totalorder %s28, 0
      %p133 = por %p131, %p132
      %p134 = scmp.ne.s32.totalorder %s122, %s123
      %p135 = scmp.eq.s32.totalorder %s29, 1
      %p136 = por %p134, %p135
      %p138 = scmp.ne.s32.totalorder %s123, %s137
      %p139 = scmp.eq.s32.totalorder %s29, 0
      %p140 = por %p138, %p139
      %s142 = sadd.s32 %s141, 1
      %p145 = scmp.eq.s32.totalorder %s23, 1
      %p146 = scmp.ne.s32.totalorder %s141, %s143
      %p147 = scmp.eq.s32.totalorder %s23, 0
      %p148 = por %p146, %p147
      %p149 = scmp.ne.s32.totalorder %s141, %s143
      %p150 = scmp.eq.s32.totalorder %s28, 1
      %p151 = por %p149, %p150
      %p152 = scmp.ne.s32.totalorder %s143, %s144
      %p153 = scmp.eq.s32.totalorder %s28, 0
      %p154 = por %p152, %p153
      %p155 = scmp.ne.s32.totalorder %s143, %s144
      %p156 = scmp.eq.s32.totalorder %s29, 1
      %p157 = por %p155, %p156
      %p159 = scmp.ne.s32.totalorder %s144, %s158
      %p160 = scmp.eq.s32.totalorder %s29, 0
      %p161 = por %p159, %p160
      %s163 = sadd.s32 %s162, 1
      %p166 = scmp.eq.s32.totalorder %s23, 1
      %p167 = scmp.ne.s32.totalorder %s162, %s164
      %p168 = scmp.eq.s32.totalorder %s23, 0
      %p169 = por %p167, %p168
      %p170 = scmp.ne.s32.totalorder %s162, %s164
      %p171 = scmp.eq.s32.totalorder %s28, 1
      %p172 = por %p170, %p171
      %p173 = scmp.ne.s32.totalorder %s164, %s165
      %p174 = scmp.eq.s32.totalorder %s28, 0
      %p175 = por %p173, %p174
      %p176 = scmp.ne.s32.totalorder %s164, %s165
      %p177 = scmp.eq.s32.totalorder %s29, 1
      %p178 = por %p176, %p177
      %p180 = scmp.ne.s32.totalorder %s165, %s179
      %p181 = scmp.eq.s32.totalorder %s29, 0
      %p182 = por %p180, %p181
      %s184 = sadd.s32 %s183, 1
      %p187 = scmp.eq.s32.totalorder %s23, 1
      %p188 = scmp.ne.s32.totalorder %s183, %s185
      %p189 = scmp.eq.s32.totalorder %s23, 0
      %p190 = por %p188, %p189
      %p191 = scmp.ne.s32.totalorder %s183, %s185
      %p192 = scmp.eq.s32.totalorder %s28, 1
      %p193 = por %p191, %p192
      %p194 = scmp.ne.s32.totalorder %s185, %s186
      %p195 = scmp.eq.s32.totalorder %s28, 0
      %p196 = por %p194, %p195
      %p197 = scmp.ne.s32.totalorder %s185, %s186
      %p198 = scmp.eq.s32.totalorder %s29, 1
      %p199 = por %p197, %p198
      %p201 = scmp.ne.s32.totalorder %s186, %s200
      %p202 = scmp.eq.s32.totalorder %s29, 0
      %p203 = por %p201, %p202
      %s205 = sadd.s32 %s204, 1
      %p208 = scmp.eq.s32.totalorder %s23, 1
      %p209 = scmp.ne.s32.totalorder %s204, %s206
      %p210 = scmp.eq.s32.totalorder %s23, 0
      %p211 = por %p209, %p210
      %p212 = scmp.ne.s32.totalorder %s204, %s206
      %p213 = scmp.eq.s32.totalorder %s28, 1
      %p214 = por %p212, %p213
      %p215 = scmp.ne.s32.totalorder %s206, %s207
      %p216 = scmp.eq.s32.totalorder %s28, 0
      %p217 = por %p215, %p216
      %p218 = scmp.ne.s32.totalorder %s206, %s207
      %p219 = scmp.eq.s32.totalorder %s29, 1
      %p220 = por %p218, %p219
      %p222 = scmp.ne.s32.totalorder %s207, %s221
      %p223 = scmp.eq.s32.totalorder %s29, 0
      %p224 = por %p222, %p223
      %s226 = sadd.s32 %s225, 1
      %p229 = scmp.eq.s32.totalorder %s23, 1
      %p230 = scmp.ne.s32.totalorder %s225, %s227
      %p231 = scmp.eq.s32.totalorder %s23, 0
      %p232 = por %p230, %p231
      %p233 = scmp.ne.s32.totalorder %s225, %s227
      %p234 = scmp.eq.s32.totalorder %s28, 1
      %p235 = por %p233, %p234
      %p236 = scmp.ne.s32.totalorder %s227, %s228
      %p237 = scmp.eq.s32.totalorder %s28, 0
      %p238 = por %p236, %p237
      %p239 = scmp.ne.s32.totalorder %s227, %s228
      %p240 = scmp.eq.s32.totalorder %s29, 1
      %p241 = por %p239, %p240
      %p243 = scmp.ne.s32.totalorder %s228, %s242
      %p244 = scmp.eq.s32.totalorder %s29, 0
      %p245 = por %p243, %p244
      %s247 = sadd.s32 %s246, 1
      %p250 = scmp.eq.s32.totalorder %s23, 1
      %p251 = scmp.ne.s32.totalorder %s246, %s248
      %p252 = scmp.eq.s32.totalorder %s23, 0
      %p253 = por %p251, %p252
      %p254 = scmp.ne.s32.totalorder %s246, %s248
      %p255 = scmp.eq.s32.totalorder %s28, 1
      %p256 = por %p254, %p255
      %p257 = scmp.ne.s32.totalorder %s248, %s249
      %p258 = scmp.eq.s32.totalorder %s28, 0
      %p259 = por %p257, %p258
      %p260 = scmp.ne.s32.totalorder %s248, %s249
      %p261 = scmp.eq.s32.totalorder %s29, 1
      %p262 = por %p260, %p261
      %p264 = scmp.ne.s32.totalorder %s249, %s263
      %p265 = scmp.eq.s32.totalorder %s29, 0
      %p266 = por %p264, %p265
      %s268 = sadd.s32 %s267, 1
      %p271 = scmp.eq.s32.totalorder %s23, 1
      %p272 = scmp.ne.s32.totalorder %s267, %s269
      %p273 = scmp.eq.s32.totalorder %s23, 0
      %p274 = por %p272, %p273
      %p275 = scmp.ne.s32.totalorder %s267, %s269
      %p276 = scmp.eq.s32.totalorder %s28, 1
      %p277 = por %p275, %p276
      %p278 = scmp.ne.s32.totalorder %s269, %s270
      %p279 = scmp.eq.s32.totalorder %s28, 0
      %p280 = por %p278, %p279
      %p281 = scmp.ne.s32.totalorder %s269, %s270
      %p282 = scmp.eq.s32.totalorder %s29, 1
      %p283 = por %p281, %p282
      %p285 = scmp.ne.s32.totalorder %s270, %s284
      %p286 = scmp.eq.s32.totalorder %s29, 0
      %p287 = por %p285, %p286
      %s288 = ssub.s32 %s23, %s30
      %p289 = scmp.eq.s32.totalorder %s288, 0
      %s291 = sadd.s32 %s290, 1
      %s292 = scalar_select %p289, %s290, %s291
      %p295 = pneg %p289
      %p296 = scmp.eq.s32.totalorder %s23, 1
      %p297 = por %p295, %p296
      %p298 = scmp.ne.s32.totalorder %s290, %s293
      %p299 = scmp.eq.s32.totalorder %s23, 0
      %p300 = por %p298, %p299
      %p301 = scmp.ne.s32.totalorder %s290, %s293
      %p302 = scmp.eq.s32.totalorder %s28, 1
      %p303 = por %p301, %p302
      %p304 = scmp.ne.s32.totalorder %s293, %s294
      %p305 = scmp.eq.s32.totalorder %s28, 0
      %p306 = por %p304, %p305
      %p307 = scmp.ne.s32.totalorder %s293, %s294
      %p308 = scmp.eq.s32.totalorder %s29, 1
      %p309 = por %p307, %p308
      %p311 = scmp.ne.s32.totalorder %s294, %s310
      %p312 = scmp.eq.s32.totalorder %s29, 0
      %p313 = por %p311, %p312
      %p314 = scmp.le.s32.totalorder 1, %s23
      %p315 = scmp.lt.s32.totalorder %s23, 3
      %p316 = pnand %p314, %p315
      %p317 = pneg %p316
      // Predicated region
      $region9: #{infer_capsule_apply.1} parent=5 // pred_check
        _
      $region10: #{infer_capsule_apply.1} parent=5 // pred_check_branch
        %319 = sbr.rel (%p316) target = $region12
      $region11: #{infer_capsule_apply.1} parent=5 // pred_region
        %s320 = ssub.s32 %s23, 1
        // Predicated region
        $region13: #{infer_capsule_apply.1} parent=11 // pred_check
          %p321 = pneg %p70
        $region14: #{infer_capsule_apply.1} parent=11 // pred_check_branch
          %323 = sbr.rel (%p321) target = $region16
        $region15: #{infer_capsule_apply.1} parent=11 // pred_region
          %s325 = ssub.s32 4096, 4096
          %326 = vsyncadd [#allocation3], %s325
          %s327 = sshll.u32 [#allocation2], 4
          %s328 = int_to_ptr.vmem [resolvable:$true] %s327
          %333 = dma.hbm_to_vmem [thread:$0]  %s1, 4096, %s328, [#allocation3], 256, 256, 16
        $region16: #{infer_capsule_apply.1} parent=11 // pred_fallthru
          _
        // Predicated region
        $region17: #{infer_capsule_apply.1} parent=11 // pred_check
          %p334 = pneg %p91
        $region18: #{infer_capsule_apply.1} parent=11 // pred_check_branch
          %336 = sbr.rel (%p334) target = $region20
        $region19: #{infer_capsule_apply.1} parent=11 // pred_region
          %s338 = ssub.s32 16384, 16384
          %339 = vsyncadd [#allocation5], %s338
          %s340 = sshll.u32 [#allocation4], 4
          %s341 = int_to_ptr.vmem [resolvable:$true] %s340
          %346 = dma.hbm_to_vmem [thread:$0]  %s2, 16384, %s341, [#allocation5], 512, 512, 32
        $region20: #{infer_capsule_apply.1} parent=11 // pred_fallthru
          _
        // Predicated region
        $region21: #{infer_capsule_apply.1} parent=11 // pred_check
          %p347 = pneg %p112
        $region22: #{infer_capsule_apply.1} parent=11 // pred_check_branch
          %349 = sbr.rel (%p347) target = $region24
        $region23: #{infer_capsule_apply.1} parent=11 // pred_region
          %s351 = ssub.s32 32768, 32768
          %352 = vsyncadd [#allocation5], %s351
          %s353 = sshll.u32 [#allocation6], 4
          %s354 = int_to_ptr.vmem [resolvable:$true] %s353
          %359 = dma.hbm_to_vmem [thread:$0]  %s3, 32768, %s354, [#allocation5], 512, 512, 32
        $region24: #{infer_capsule_apply.1} parent=11 // pred_fallthru
          _
        // Predicated region
        $region25: #{infer_capsule_apply.1} parent=11 // pred_check
          %p360 = pneg %p133
        $region26: #{infer_capsule_apply.1} parent=11 // pred_check_branch
          %362 = sbr.rel (%p360) target = $region28
        $region27: #{infer_capsule_apply.1} parent=11 // pred_region
          %s364 = ssub.s32 8192, 8192
          %365 = vsyncadd [#allocation8], %s364
          %s366 = sshll.u32 [#allocation7], 4
          %s367 = int_to_ptr.vmem [resolvable:$true] %s366
          %372 = dma.hbm_to_vmem [thread:$0]  %s4, 8192, %s367, [#allocation8], 128, 128, 8
        $region28: #{infer_capsule_apply.1} parent=11 // pred_fallthru
          _
        // Predicated region
        $region29: #{infer_capsule_apply.1} parent=11 // pred_check
          %p373 = pneg %p154
        $region30: #{infer_capsule_apply.1} parent=11 // pred_check_branch
          %375 = sbr.rel (%p373) target = $region32
        $region31: #{infer_capsule_apply.1} parent=11 // pred_region
          _
        $region32: #{infer_capsule_apply.1} parent=11 // pred_fallthru
          _
        // Predicated region
        $region33: #{infer_capsule_apply.1} parent=11 // pred_check
          %p376 = pneg %p175
        $region34: #{infer_capsule_apply.1} parent=11 // pred_check_branch
          %378 = sbr.rel (%p376) target = $region36
        $region35: #{infer_capsule_apply.1} parent=11 // pred_region
          %s380 = ssub.s32 512, 512
          %381 = vsyncadd [#allocation8], %s380
          %s382 = sshll.u32 [#allocation9], 4
          %s383 = int_to_ptr.vmem [resolvable:$true] %s382
          %388 = dma.hbm_to_vmem [thread:$0]  %s6, 512, %s383, [#allocation8], 128, 128, 8
        $region36: #{infer_capsule_apply.1} parent=11 // pred_fallthru
          _
        // Predicated region
        $region37: #{infer_capsule_apply.1} parent=11 // pred_check
          %p389 = pneg %p196
        $region38: #{infer_capsule_apply.1} parent=11 // pred_check_branch
          %391 = sbr.rel (%p389) target = $region40
        $region39: #{infer_capsule_apply.1} parent=11 // pred_region
          _
        $region40: #{infer_capsule_apply.1} parent=11 // pred_fallthru
          _
        // Predicated region
        $region41: #{infer_capsule_apply.1} parent=11 // pred_check
          %p392 = pneg %p217
        $region42: #{infer_capsule_apply.1} parent=11 // pred_check_branch
          %394 = sbr.rel (%p392) target = $region44
        $region43: #{infer_capsule_apply.1} parent=11 // pred_region
          %s396 = ssub.s32 4096, 4096
          %397 = vsyncadd [#allocation11], %s396
          %s398 = sshll.u32 [#allocation10], 4
          %s399 = int_to_ptr.vmem [resolvable:$true] %s398
          %404 = dma.hbm_to_vmem [thread:$0]  %s8, 4096, %s399, [#allocation11], 128, 128, 8
        $region44: #{infer_capsule_apply.1} parent=11 // pred_fallthru
          _
        // Predicated region
        $region45: #{infer_capsule_apply.1} parent=11 // pred_check
          %p405 = pneg %p238
        $region46: #{infer_capsule_apply.1} parent=11 // pred_check_branch
          %407 = sbr.rel (%p405) target = $region48
        $region47: #{infer_capsule_apply.1} parent=11 // pred_region
          %s409 = ssub.s32 512, 512
          %410 = vsyncadd [#allocation11], %s409
          %s411 = sshll.u32 [#allocation12], 4
          %s412 = int_to_ptr.vmem [resolvable:$true] %s411
          %417 = dma.hbm_to_vmem [thread:$0]  %s9, 512, %s412, [#allocation11], 128, 128, 8
        $region48: #{infer_capsule_apply.1} parent=11 // pred_fallthru
          _
        // Predicated region
        $region49: #{infer_capsule_apply.1} parent=11 // pred_check
          %p418 = pneg %p259
        $region50: #{infer_capsule_apply.1} parent=11 // pred_check_branch
          %420 = sbr.rel (%p418) target = $region52
        $region51: #{infer_capsule_apply.1} parent=11 // pred_region
          %s422 = ssub.s32 512, 512
          %423 = vsyncadd [#allocation14], %s422
          %s424 = sshll.u32 [#allocation13], 4
          %s425 = int_to_ptr.vmem [resolvable:$true] %s424
          %430 = dma.hbm_to_vmem [thread:$0]  %s10, 512, %s425, [#allocation14], 128, 128, 8
        $region52: #{infer_capsule_apply.1} parent=11 // pred_fallthru
          _
        // Predicated region
        $region53: #{infer_capsule_apply.1} parent=11 // pred_check
          %p431 = pneg %p280
        $region54: #{infer_capsule_apply.1} parent=11 // pred_check_branch
          %433 = sbr.rel (%p431) target = $region56
        $region55: #{infer_capsule_apply.1} parent=11 // pred_region
          _
        $region56: #{infer_capsule_apply.1} parent=11 // pred_fallthru
          _
      $region12: #{infer_capsule_apply.1} parent=5 // pred_fallthru
        _
      %p434 = scmp.lt.s32.totalorder %s23, 2
      // Predicated region
      $region57: #{infer_capsule_apply.1} parent=5 // pred_check
        %p435 = pneg %p434
      $region58: #{infer_capsule_apply.1} parent=5 // pred_check_branch
        %437 = sbr.rel (%p435) target = $region60
      $region59: #{infer_capsule_apply.1} parent=5 // pred_region
        // Predicated region
        $region61: #{infer_capsule_apply.1} parent=59 // pred_check
          %p438 = pneg %p43
        $region62: #{infer_capsule_apply.1} parent=59 // pred_check_branch
          %440 = sbr.rel (%p438) target = $region64
        $region63: #{infer_capsule_apply.1} parent=59 // pred_region
          %p441 = scmp.lt.s32.totalorder %s23, 1
          %s442 = scalar_select %p441, %s23, 1
          %s443 = smul.addr %s442, 8
          %s444 = scalar_lea.vmem %s0, %s443
        $region64: #{infer_capsule_apply.1} parent=59 // pred_fallthru
          _
      $region60: #{infer_capsule_apply.1} parent=5 // pred_fallthru
        _
      %p445 = scmp.le.s32.totalorder 1, %s23
      %p446 = scmp.lt.s32.totalorder %s23, 3
      %p447 = pnand %p445, %p446
      %p448 = pneg %p447
      // Predicated region
      $region65: #{infer_capsule_apply.1} parent=5 // pred_check
        _
      $region66: #{infer_capsule_apply.1} parent=5 // pred_check_branch
        %450 = sbr.rel (%p447) target = $region68
      $region67: #{infer_capsule_apply.1} parent=5 // pred_region
        %s451 = ssub.s32 %s23, 1
        // Predicated region
        $region69: #{infer_capsule_apply.1} parent=67 // pred_check
          %p452 = pneg %p70
        $region70: #{infer_capsule_apply.1} parent=67 // pred_check_branch
          %454 = sbr.rel (%p452) target = $region72
        $region71: #{infer_capsule_apply.1} parent=67 // pred_region
          %455 = dma.done [#allocation3], 4096
        $region72: #{infer_capsule_apply.1} parent=67 // pred_fallthru
          _
        // Predicated region
        $region73: #{infer_capsule_apply.1} parent=67 // pred_check
          %p456 = pneg %p91
        $region74: #{infer_capsule_apply.1} parent=67 // pred_check_branch
          %458 = sbr.rel (%p456) target = $region76
        $region75: #{infer_capsule_apply.1} parent=67 // pred_region
          %459 = dma.done [#allocation5], 16384
        $region76: #{infer_capsule_apply.1} parent=67 // pred_fallthru
          _
        // Predicated region
        $region77: #{infer_capsule_apply.1} parent=67 // pred_check
          %p460 = pneg %p112
        $region78: #{infer_capsule_apply.1} parent=67 // pred_check_branch
          %462 = sbr.rel (%p460) target = $region80
        $region79: #{infer_capsule_apply.1} parent=67 // pred_region
          %463 = dma.done [#allocation5], 32768
        $region80: #{infer_capsule_apply.1} parent=67 // pred_fallthru
          _
        // Predicated region
        $region81: #{infer_capsule_apply.1} parent=67 // pred_check
          %p464 = pneg %p133
        $region82: #{infer_capsule_apply.1} parent=67 // pred_check_branch
          %466 = sbr.rel (%p464) target = $region84
        $region83: #{infer_capsule_apply.1} parent=67 // pred_region
          %467 = dma.done [#allocation8], 8192
        $region84: #{infer_capsule_apply.1} parent=67 // pred_fallthru
          _
        // Predicated region
        $region85: #{infer_capsule_apply.1} parent=67 // pred_check
          %p468 = pneg %p175
        $region86: #{infer_capsule_apply.1} parent=67 // pred_check_branch
          %470 = sbr.rel (%p468) target = $region88
        $region87: #{infer_capsule_apply.1} parent=67 // pred_region
          %471 = dma.done [#allocation8], 512
        $region88: #{infer_capsule_apply.1} parent=67 // pred_fallthru
          _
        // Predicated region
        $region89: #{infer_capsule_apply.1} parent=67 // pred_check
          %p472 = pneg %p217
        $region90: #{infer_capsule_apply.1} parent=67 // pred_check_branch
          %474 = sbr.rel (%p472) target = $region92
        $region91: #{infer_capsule_apply.1} parent=67 // pred_region
          %475 = dma.done [#allocation11], 4096
        $region92: #{infer_capsule_apply.1} parent=67 // pred_fallthru
          _
        // Predicated region
        $region93: #{infer_capsule_apply.1} parent=67 // pred_check
          %p476 = pneg %p238
        $region94: #{infer_capsule_apply.1} parent=67 // pred_check_branch
          %478 = sbr.rel (%p476) target = $region96
        $region95: #{infer_capsule_apply.1} parent=67 // pred_region
          %479 = dma.done [#allocation11], 512
        $region96: #{infer_capsule_apply.1} parent=67 // pred_fallthru
          _
        // Predicated region
        $region97: #{infer_capsule_apply.1} parent=67 // pred_check
          %p480 = pneg %p259
        $region98: #{infer_capsule_apply.1} parent=67 // pred_check_branch
          %482 = sbr.rel (%p480) target = $region100
        $region99: #{infer_capsule_apply.1} parent=67 // pred_region
          %483 = dma.done [#allocation14], 512
        $region100: #{infer_capsule_apply.1} parent=67 // pred_fallthru
          _
        %p484 = scmp.lt.s32.totalorder %s28, 1
        %s485 = scalar_select %p484, %s28, 1
        %s486 = smul.addr %s485, 8
        %s487 = scalar_lea.vmem %s0, %s486
        %p488 = pneg %p49
        %p489 = pneg %p46
        %p490 = pneg %p70
        %p491 = pneg %p67
        %p492 = pneg %p91
        %p493 = pneg %p88
        %p494 = pneg %p112
        %p495 = pneg %p109
        %p496 = pneg %p133
        %p497 = pneg %p130
        %p498 = pneg %p154
        %p499 = pneg %p151
        %p500 = pneg %p175
        %p501 = pneg %p172
        %p502 = pneg %p196
        %p503 = pneg %p193
        %p504 = pneg %p217
        %p505 = pneg %p214
        %p506 = pneg %p238
        %p507 = pneg %p235
        %p508 = pneg %p259
        %p509 = pneg %p256
        %p510 = pneg %p280
        %p511 = pneg %p277
        %p512 = pneg %p306
        %p513 = pneg %p303
        %p514 = scmp.lt.s32.totalorder %s28, 1
        %s515 = scalar_select %p514, %s28, 1
        %s516 = smul.addr %s515, 8
        %s517 = scalar_lea.vmem %s12, %s516
        %p518 = scmp.lt.s32.totalorder %s28, 1
        %s519 = scalar_select %p518, %s28, 1
        %s520 = smul.addr %s519, 8
        %s521 = scalar_lea.vmem %s0, %s520
        %p522 = scmp.lt.s32.totalorder %s28, 1
        %s523 = scalar_select %p522, %s28, 1
        %s524 = smul.addr %s523, 8
        %s525 = scalar_lea.vmem %s12, %s524
        %v526 = vld [vmem:[%s521] sm:$0xff]
        %v527 = vld [vmem:[#allocation2] sm:$0xff]
        %v528 = vld [vmem:[#allocation2 + $0x8] sm:$0xff]
        %v529 = vld [vmem:[#allocation2 + $0x10] sm:$0xff]
        %v530 = vld [vmem:[#allocation2 + $0x18] sm:$0xff]
        %v531 = vld [vmem:[#allocation2 + $0x20] sm:$0xff]
        %v532 = vld [vmem:[#allocation2 + $0x28] sm:$0xff]
        %v533 = vld [vmem:[#allocation2 + $0x30] sm:$0xff]
        %v534 = vld [vmem:[#allocation2 + $0x38] sm:$0xff]
        %v535 = vld [vmem:[#allocation2 + $0x40] sm:$0xff]
        %v536 = vld [vmem:[#allocation2 + $0x48] sm:$0xff]
        %v537 = vld [vmem:[#allocation2 + $0x50] sm:$0xff]
        %v538 = vld [vmem:[#allocation2 + $0x58] sm:$0xff]
        %v539 = vld [vmem:[#allocation2 + $0x60] sm:$0xff]
        %v540 = vld [vmem:[#allocation2 + $0x68] sm:$0xff]
        %v541 = vld [vmem:[#allocation2 + $0x70] sm:$0xff]
        %v542 = vld [vmem:[#allocation2 + $0x78] sm:$0xff]
        %v543 = vld [vmem:[#allocation2 + $0x80] sm:$0xff]
        %v544 = vld [vmem:[#allocation2 + $0x88] sm:$0xff]
        %v545 = vld [vmem:[#allocation2 + $0x90] sm:$0xff]
        %v546 = vld [vmem:[#allocation2 + $0x98] sm:$0xff]
        %v547 = vld [vmem:[#allocation2 + $0xa0] sm:$0xff]
        %v548 = vld [vmem:[#allocation2 + $0xa8] sm:$0xff]
        %v549 = vld [vmem:[#allocation2 + $0xb0] sm:$0xff]
        %v550 = vld [vmem:[#allocation2 + $0xb8] sm:$0xff]
        %v551 = vld [vmem:[#allocation2 + $0xc0] sm:$0xff]
        %v552 = vld [vmem:[#allocation2 + $0xc8] sm:$0xff]
        %v553 = vld [vmem:[#allocation2 + $0xd0] sm:$0xff]
        %v554 = vld [vmem:[#allocation2 + $0xd8] sm:$0xff]
        %v555 = vld [vmem:[#allocation2 + $0xe0] sm:$0xff]
        %v556 = vld [vmem:[#allocation2 + $0xe8] sm:$0xff]
        %v557 = vld [vmem:[#allocation2 + $0xf0] sm:$0xff]
        %v558 = vld [vmem:[#allocation2 + $0xf8] sm:$0xff]
        %559 = vmatprep.subr.mxu0 %v528
        %560 = vmatpush1.msra.mxu0 %v527
        %561 = vmatprep.subr.mxu0 %v530
        %562 = vmatpush1.msra.mxu0 %v529
        %563 = vmatprep.subr.mxu0 %v532
        %564 = vmatpush1.msra.mxu0 %v531
        %565 = vmatprep.subr.mxu0 %v534
        %566 = vmatpush1.msra.mxu0 %v533
        %567 = vmatprep.subr.mxu0 %v536
        %568 = vmatpush1.msra.mxu0 %v535
        %569 = vmatprep.subr.mxu0 %v538
        %570 = vmatpush1.msra.mxu0 %v537
        %571 = vmatprep.subr.mxu0 %v540
        %572 = vmatpush1.msra.mxu0 %v539
        %573 = vmatprep.subr.mxu0 %v542
        %574 = vmatpush1.msra.mxu0 %v541
        %575 = vmatprep.subr.mxu0 %v544
        %576 = vmatpush1.msra.mxu0 %v543
        %577 = vmatprep.subr.mxu0 %v546
        %578 = vmatpush1.msra.mxu0 %v545
        %579 = vmatprep.subr.mxu0 %v548
        %580 = vmatpush1.msra.mxu0 %v547
        %581 = vmatprep.subr.mxu0 %v550
        %582 = vmatpush1.msra.mxu0 %v549
        %583 = vmatprep.subr.mxu0 %v552
        %584 = vmatpush1.msra.mxu0 %v551
        %585 = vmatprep.subr.mxu0 %v554
        %586 = vmatpush1.msra.mxu0 %v553
        %587 = vmatprep.subr.mxu0 %v556
        %588 = vmatpush1.msra.mxu0 %v555
        %589 = vmatprep.subr.mxu0 %v558
        %590 = vmatpush1.msra.mxu0 %v557
        %591 = vmatprep.subr.mxu0 0.0
        %592 = vmatpush1.msra.mxu0 0.0
        %593 = vmatprep.subr.mxu0 0.0
        %594 = vmatpush1.msra.mxu0 0.0
        %595 = vmatprep.subr.mxu0 0.0
        %596 = vmatpush1.msra.mxu0 0.0
        %597 = vmatprep.subr.mxu0 0.0
        %598 = vmatpush1.msra.mxu0 0.0
        %599 = vmatprep.subr.mxu0 0.0
        %600 = vmatpush1.msra.mxu0 0.0
        %601 = vmatprep.subr.mxu0 0.0
        %602 = vmatpush1.msra.mxu0 0.0
        %603 = vmatprep.subr.mxu0 0.0
        %604 = vmatpush1.msra.mxu0 0.0
        %605 = vmatprep.subr.mxu0 0.0
        %606 = vmatpush1.msra.mxu0 0.0
        %607 = vmatprep.subr.mxu0 0.0
        %608 = vmatpush1.msra.mxu0 0.0
        %609 = vmatprep.subr.mxu0 0.0
        %610 = vmatpush1.msra.mxu0 0.0
        %611 = vmatprep.subr.mxu0 0.0
        %612 = vmatpush1.msra.mxu0 0.0
        %613 = vmatprep.subr.mxu0 0.0
        %614 = vmatpush1.msra.mxu0 0.0
        %615 = vmatprep.subr.mxu0 0.0
        %616 = vmatpush1.msra.mxu0 0.0
        %617 = vmatprep.subr.mxu0 0.0
        %618 = vmatpush1.msra.mxu0 0.0
        %619 = vmatprep.subr.mxu0 0.0
        %620 = vmatpush1.msra.mxu0 0.0
        %621 = vmatprep.subr.mxu0 0.0
        %622 = vmatpush1.msra.mxu0 0.0
        %623 = vmatprep.mubr.f32.mxu0 0.0
        %624 = vmatmul.mubr.f32.gmra.mrb[0].mxu0 %v526
        %v625 = vpop.f32.mrb[0].mxu0
        %v626 = vadd.f32 0.0, %v625
        %v627 = vpop.f32.mrb[0].mxu0
        %v628 = vadd.f32 0.0, %v627
        %629 = vdwg.mxu0
        %v630 = vld [vmem:[#allocation4] sm:$0xff]
        %v631 = vld [vmem:[#allocation4 + $0x8] sm:$0xff]
        %v632 = vld [vmem:[#allocation4 + $0x10] sm:$0xff]
        %v633 = vld [vmem:[#allocation4 + $0x18] sm:$0xff]
        %v634 = vld [vmem:[#allocation4 + $0x20] sm:$0xff]
        %v635 = vld [vmem:[#allocation4 + $0x28] sm:$0xff]
        %v636 = vld [vmem:[#allocation4 + $0x30] sm:$0xff]
        %v637 = vld [vmem:[#allocation4 + $0x38] sm:$0xff]
        %v638 = vld [vmem:[#allocation4 + $0x40] sm:$0xff]
        %v639 = vld [vmem:[#allocation4 + $0x48] sm:$0xff]
        %v640 = vld [vmem:[#allocation4 + $0x50] sm:$0xff]
        %v641 = vld [vmem:[#allocation4 + $0x58] sm:$0xff]
        %v642 = vld [vmem:[#allocation4 + $0x60] sm:$0xff]
        %v643 = vld [vmem:[#allocation4 + $0x68] sm:$0xff]
        %v644 = vld [vmem:[#allocation4 + $0x70] sm:$0xff]
        %v645 = vld [vmem:[#allocation4 + $0x78] sm:$0xff]
        %v646 = vld [vmem:[#allocation4 + $0x80] sm:$0xff]
        %v647 = vld [vmem:[#allocation4 + $0x88] sm:$0xff]
        %v648 = vld [vmem:[#allocation4 + $0x90] sm:$0xff]
        %v649 = vld [vmem:[#allocation4 + $0x98] sm:$0xff]
        %v650 = vld [vmem:[#allocation4 + $0xa0] sm:$0xff]
        %v651 = vld [vmem:[#allocation4 + $0xa8] sm:$0xff]
        %v652 = vld [vmem:[#allocation4 + $0xb0] sm:$0xff]
        %v653 = vld [vmem:[#allocation4 + $0xb8] sm:$0xff]
        %v654 = vld [vmem:[#allocation4 + $0xc0] sm:$0xff]
        %v655 = vld [vmem:[#allocation4 + $0xc8] sm:$0xff]
        %v656 = vld [vmem:[#allocation4 + $0xd0] sm:$0xff]
        %v657 = vld [vmem:[#allocation4 + $0xd8] sm:$0xff]
        %v658 = vld [vmem:[#allocation4 + $0xe0] sm:$0xff]
        %v659 = vld [vmem:[#allocation4 + $0xe8] sm:$0xff]
        %v660 = vld [vmem:[#allocation4 + $0xf0] sm:$0xff]
        %v661 = vld [vmem:[#allocation4 + $0xf8] sm:$0xff]
        %v662 = vld [vmem:[#allocation4 + $0x100] sm:$0xff]
        %v663 = vld [vmem:[#allocation4 + $0x108] sm:$0xff]
        %v664 = vld [vmem:[#allocation4 + $0x110] sm:$0xff]
        %v665 = vld [vmem:[#allocation4 + $0x118] sm:$0xff]
        %v666 = vld [vmem:[#allocation4 + $0x120] sm:$0xff]
        %v667 = vld [vmem:[#allocation4 + $0x128] sm:$0xff]
        %v668 = vld [vmem:[#allocation4 + $0x130] sm:$0xff]
        %v669 = vld [vmem:[#allocation4 + $0x138] sm:$0xff]
        %v670 = vld [vmem:[#allocation4 + $0x140] sm:$0xff]
        %v671 = vld [vmem:[#allocation4 + $0x148] sm:$0xff]
        %v672 = vld [vmem:[#allocation4 + $0x150] sm:$0xff]
        %v673 = vld [vmem:[#allocation4 + $0x158] sm:$0xff]
        %v674 = vld [vmem:[#allocation4 + $0x160] sm:$0xff]
        %v675 = vld [vmem:[#allocation4 + $0x168] sm:$0xff]
        %v676 = vld [vmem:[#allocation4 + $0x170] sm:$0xff]
        %v677 = vld [vmem:[#allocation4 + $0x178] sm:$0xff]
        %v678 = vld [vmem:[#allocation4 + $0x180] sm:$0xff]
        %v679 = vld [vmem:[#allocation4 + $0x188] sm:$0xff]
        %v680 = vld [vmem:[#allocation4 + $0x190] sm:$0xff]
        %v681 = vld [vmem:[#allocation4 + $0x198] sm:$0xff]
        %v682 = vld [vmem:[#allocation4 + $0x1a0] sm:$0xff]
        %v683 = vld [vmem:[#allocation4 + $0x1a8] sm:$0xff]
        %v684 = vld [vmem:[#allocation4 + $0x1b0] sm:$0xff]
        %v685 = vld [vmem:[#allocation4 + $0x1b8] sm:$0xff]
        %v686 = vld [vmem:[#allocation4 + $0x1c0] sm:$0xff]
        %v687 = vld [vmem:[#allocation4 + $0x1c8] sm:$0xff]
        %v688 = vld [vmem:[#allocation4 + $0x1d0] sm:$0xff]
        %v689 = vld [vmem:[#allocation4 + $0x1d8] sm:$0xff]
        %v690 = vld [vmem:[#allocation4 + $0x1e0] sm:$0xff]
        %v691 = vld [vmem:[#allocation4 + $0x1e8] sm:$0xff]
        %v692 = vld [vmem:[#allocation4 + $0x1f0] sm:$0xff]
        %v693 = vld [vmem:[#allocation4 + $0x1f8] sm:$0xff]
        %v694 = vld [vmem:[#allocation4 + $0x200] sm:$0xff]
        %v695 = vld [vmem:[#allocation4 + $0x208] sm:$0xff]
        %v696 = vld [vmem:[#allocation4 + $0x210] sm:$0xff]
        %v697 = vld [vmem:[#allocation4 + $0x218] sm:$0xff]
        %v698 = vld [vmem:[#allocation4 + $0x220] sm:$0xff]
        %v699 = vld [vmem:[#allocation4 + $0x228] sm:$0xff]
        %v700 = vld [vmem:[#allocation4 + $0x230] sm:$0xff]
        %v701 = vld [vmem:[#allocation4 + $0x238] sm:$0xff]
        %v702 = vld [vmem:[#allocation4 + $0x240] sm:$0xff]
        %v703 = vld [vmem:[#allocation4 + $0x248] sm:$0xff]
        %v704 = vld [vmem:[#allocation4 + $0x250] sm:$0xff]
        %v705 = vld [vmem:[#allocation4 + $0x258] sm:$0xff]
        %v706 = vld [vmem:[#allocation4 + $0x260] sm:$0xff]
        %v707 = vld [vmem:[#allocation4 + $0x268] sm:$0xff]
        %v708 = vld [vmem:[#allocation4 + $0x270] sm:$0xff]
        %v709 = vld [vmem:[#allocation4 + $0x278] sm:$0xff]
        %v710 = vld [vmem:[#allocation4 + $0x280] sm:$0xff]
        %v711 = vld [vmem:[#allocation4 + $0x288] sm:$0xff]
        %v712 = vld [vmem:[#allocation4 + $0x290] sm:$0xff]
        %v713 = vld [vmem:[#allocation4 + $0x298] sm:$0xff]
        %v714 = vld [vmem:[#allocation4 + $0x2a0] sm:$0xff]
        %v715 = vld [vmem:[#allocation4 + $0x2a8] sm:$0xff]
        %v716 = vld [vmem:[#allocation4 + $0x2b0] sm:$0xff]
        %v717 = vld [vmem:[#allocation4 + $0x2b8] sm:$0xff]
        %v718 = vld [vmem:[#allocation4 + $0x2c0] sm:$0xff]
        %v719 = vld [vmem:[#allocation4 + $0x2c8] sm:$0xff]
        %v720 = vld [vmem:[#allocation4 + $0x2d0] sm:$0xff]
        %v721 = vld [vmem:[#allocation4 + $0x2d8] sm:$0xff]
        %v722 = vld [vmem:[#allocation4 + $0x2e0] sm:$0xff]
        %v723 = vld [vmem:[#allocation4 + $0x2e8] sm:$0xff]
        %v724 = vld [vmem:[#allocation4 + $0x2f0] sm:$0xff]
        %v725 = vld [vmem:[#allocation4 + $0x2f8] sm:$0xff]
        %v726 = vld [vmem:[#allocation4 + $0x300] sm:$0xff]
        %v727 = vld [vmem:[#allocation4 + $0x308] sm:$0xff]
        %v728 = vld [vmem:[#allocation4 + $0x310] sm:$0xff]
        %v729 = vld [vmem:[#allocation4 + $0x318] sm:$0xff]
        %v730 = vld [vmem:[#allocation4 + $0x320] sm:$0xff]
        %v731 = vld [vmem:[#allocation4 + $0x328] sm:$0xff]
        %v732 = vld [vmem:[#allocation4 + $0x330] sm:$0xff]
        %v733 = vld [vmem:[#allocation4 + $0x338] sm:$0xff]
        %v734 = vld [vmem:[#allocation4 + $0x340] sm:$0xff]
        %v735 = vld [vmem:[#allocation4 + $0x348] sm:$0xff]
        %v736 = vld [vmem:[#allocation4 + $0x350] sm:$0xff]
        %v737 = vld [vmem:[#allocation4 + $0x358] sm:$0xff]
        %v738 = vld [vmem:[#allocation4 + $0x360] sm:$0xff]
        %v739 = vld [vmem:[#allocation4 + $0x368] sm:$0xff]
        %v740 = vld [vmem:[#allocation4 + $0x370] sm:$0xff]
        %v741 = vld [vmem:[#allocation4 + $0x378] sm:$0xff]
        %v742 = vld [vmem:[#allocation4 + $0x380] sm:$0xff]
        %v743 = vld [vmem:[#allocation4 + $0x388] sm:$0xff]
        %v744 = vld [vmem:[#allocation4 + $0x390] sm:$0xff]
        %v745 = vld [vmem:[#allocation4 + $0x398] sm:$0xff]
        %v746 = vld [vmem:[#allocation4 + $0x3a0] sm:$0xff]
        %v747 = vld [vmem:[#allocation4 + $0x3a8] sm:$0xff]
        %v748 = vld [vmem:[#allocation4 + $0x3b0] sm:$0xff]
        %v749 = vld [vmem:[#allocation4 + $0x3b8] sm:$0xff]
        %v750 = vld [vmem:[#allocation4 + $0x3c0] sm:$0xff]
        %v751 = vld [vmem:[#allocation4 + $0x3c8] sm:$0xff]
        %v752 = vld [vmem:[#allocation4 + $0x3d0] sm:$0xff]
        %v753 = vld [vmem:[#allocation4 + $0x3d8] sm:$0xff]
        %v754 = vld [vmem:[#allocation4 + $0x3e0] sm:$0xff]
        %v755 = vld [vmem:[#allocation4 + $0x3e8] sm:$0xff]
        %v756 = vld [vmem:[#allocation4 + $0x3f0] sm:$0xff]
        %v757 = vld [vmem:[#allocation4 + $0x3f8] sm:$0xff]
        %758 = vmatprep.subr.mxu0 %v631
        %759 = vmatpush1.msra.mxu0 %v630
        %760 = vmatprep.subr.mxu0 %v635
        %761 = vmatpush1.msra.mxu0 %v634
        %762 = vmatprep.subr.mxu0 %v639
        %763 = vmatpush1.msra.mxu0 %v638
        %764 = vmatprep.subr.mxu0 %v643
        %765 = vmatpush1.msra.mxu0 %v642
        %766 = vmatprep.subr.mxu0 %v647
        %767 = vmatpush1.msra.mxu0 %v646
        %768 = vmatprep.subr.mxu0 %v651
        %769 = vmatpush1.msra.mxu0 %v650
        %770 = vmatprep.subr.mxu0 %v655
        %771 = vmatpush1.msra.mxu0 %v654
        %772 = vmatprep.subr.mxu0 %v659
        %773 = vmatpush1.msra.mxu0 %v658
        %774 = vmatprep.subr.mxu0 %v663
        %775 = vmatpush1.msra.mxu0 %v662
        %776 = vmatprep.subr.mxu0 %v667
        %777 = vmatpush1.msra.mxu0 %v666
        %778 = vmatprep.subr.mxu0 %v671
        %779 = vmatpush1.msra.mxu0 %v670
        %780 = vmatprep.subr.mxu0 %v675
        %781 = vmatpush1.msra.mxu0 %v674
        %782 = vmatprep.subr.mxu0 %v679
        %783 = vmatpush1.msra.mxu0 %v678
        %784 = vmatprep.subr.mxu0 %v683
        %785 = vmatpush1.msra.mxu0 %v682
        %786 = vmatprep.subr.mxu0 %v687
        %787 = vmatpush1.msra.mxu0 %v686
        %788 = vmatprep.subr.mxu0 %v691
        %789 = vmatpush1.msra.mxu0 %v690
        %790 = vmatprep.subr.mxu0 %v695
        %791 = vmatpush1.msra.mxu0 %v694
        %792 = vmatprep.subr.mxu0 %v699
        %793 = vmatpush1.msra.mxu0 %v698
        %794 = vmatprep.subr.mxu0 %v703
        %795 = vmatpush1.msra.mxu0 %v702
        %796 = vmatprep.subr.mxu0 %v707
        %797 = vmatpush1.msra.mxu0 %v706
        %798 = vmatprep.subr.mxu0 %v711
        %799 = vmatpush1.msra.mxu0 %v710
        %800 = vmatprep.subr.mxu0 %v715
        %801 = vmatpush1.msra.mxu0 %v714
        %802 = vmatprep.subr.mxu0 %v719
        %803 = vmatpush1.msra.mxu0 %v718
        %804 = vmatprep.subr.mxu0 %v723
        %805 = vmatpush1.msra.mxu0 %v722
        %806 = vmatprep.subr.mxu0 %v727
        %807 = vmatpush1.msra.mxu0 %v726
        %808 = vmatprep.subr.mxu0 %v731
        %809 = vmatpush1.msra.mxu0 %v730
        %810 = vmatprep.subr.mxu0 %v735
        %811 = vmatpush1.msra.mxu0 %v734
        %812 = vmatprep.subr.mxu0 %v739
        %813 = vmatpush1.msra.mxu0 %v738
        %814 = vmatprep.subr.mxu0 %v743
        %815 = vmatpush1.msra.mxu0 %v742
        %816 = vmatprep.subr.mxu0 %v747
        %817 = vmatpush1.msra.mxu0 %v746
        %818 = vmatprep.subr.mxu0 %v751
        %819 = vmatpush1.msra.mxu0 %v750
        %820 = vmatprep.subr.mxu0 %v755
        %821 = vmatpush1.msra.mxu0 %v754
        %822 = vmatprep.mubr.f32.mxu0 %v628
        %823 = vmatmul.mubr.f32.gmra.mrb[0].mxu0 %v626
        %v824 = vpop.f32.mrb[0].mxu0
        %v825 = vadd.f32 0.0, %v824
        %v826 = vpop.f32.mrb[0].mxu0
        %v827 = vadd.f32 0.0, %v826
        %828 = vdwg.mxu0
        %829 = vmatprep.subr.mxu0 %v633
        %830 = vmatpush1.msra.mxu0 %v632
        %831 = vmatprep.subr.mxu0 %v637
        %832 = vmatpush1.msra.mxu0 %v636
        %833 = vmatprep.subr.mxu0 %v641
        %834 = vmatpush1.msra.mxu0 %v640
        %835 = vmatprep.subr.mxu0 %v645
        %836 = vmatpush1.msra.mxu0 %v644
        %837 = vmatprep.subr.mxu0 %v649
        %838 = vmatpush1.msra.mxu0 %v648
        %839 = vmatprep.subr.mxu0 %v653
        %840 = vmatpush1.msra.mxu0 %v652
        %841 = vmatprep.subr.mxu0 %v657
        %842 = vmatpush1.msra.mxu0 %v656
        %843 = vmatprep.subr.mxu0 %v661
        %844 = vmatpush1.msra.mxu0 %v660
        %845 = vmatprep.subr.mxu0 %v665
        %846 = vmatpush1.msra.mxu0 %v664
        %847 = vmatprep.subr.mxu0 %v669
        %848 = vmatpush1.msra.mxu0 %v668
        %849 = vmatprep.subr.mxu0 %v673
        %850 = vmatpush1.msra.mxu0 %v672
        %851 = vmatprep.subr.mxu0 %v677
        %852 = vmatpush1.msra.mxu0 %v676
        %853 = vmatprep.subr.mxu0 %v681
        %854 = vmatpush1.msra.mxu0 %v680
        %855 = vmatprep.subr.mxu0 %v685
        %856 = vmatpush1.msra.mxu0 %v684
        %857 = vmatprep.subr.mxu0 %v689
        %858 = vmatpush1.msra.mxu0 %v688
        %859 = vmatprep.subr.mxu0 %v693
        %860 = vmatpush1.msra.mxu0 %v692
        %861 = vmatprep.subr.mxu0 %v697
        %862 = vmatpush1.msra.mxu0 %v696
        %863 = vmatprep.subr.mxu0 %v701
        %864 = vmatpush1.msra.mxu0 %v700
        %865 = vmatprep.subr.mxu0 %v705
        %866 = vmatpush1.msra.mxu0 %v704
        %867 = vmatprep.subr.mxu0 %v709
        %868 = vmatpush1.msra.mxu0 %v708
        %869 = vmatprep.subr.mxu0 %v713
        %870 = vmatpush1.msra.mxu0 %v712
        %871 = vmatprep.subr.mxu0 %v717
        %872 = vmatpush1.msra.mxu0 %v716
        %873 = vmatprep.subr.mxu0 %v721
        %874 = vmatpush1.msra.mxu0 %v720
        %875 = vmatprep.subr.mxu0 %v725
        %876 = vmatpush1.msra.mxu0 %v724
        %877 = vmatprep.subr.mxu0 %v729
        %878 = vmatpush1.msra.mxu0 %v728
        %879 = vmatprep.subr.mxu0 %v733
        %880 = vmatpush1.msra.mxu0 %v732
        %881 = vmatprep.subr.mxu0 %v737
        %882 = vmatpush1.msra.mxu0 %v736
        %883 = vmatprep.subr.mxu0 %v741
        %884 = vmatpush1.msra.mxu0 %v740
        %885 = vmatprep.subr.mxu0 %v745
        %886 = vmatpush1.msra.mxu0 %v744
        %887 = vmatprep.subr.mxu0 %v749
        %888 = vmatpush1.msra.mxu0 %v748
        %889 = vmatprep.subr.mxu0 %v753
        %890 = vmatpush1.msra.mxu0 %v752
        %891 = vmatprep.subr.mxu0 %v757
        %892 = vmatpush1.msra.mxu0 %v756
        %893 = vmatprep.mubr.f32.mxu0 %v628
        %894 = vmatmul.mubr.f32.gmra.mrb[0].mxu0 %v626
        %v895 = vpop.f32.mrb[0].mxu0
        %v896 = vadd.f32 0.0, %v895
        %v897 = vpop.f32.mrb[0].mxu0
        %v898 = vadd.f32 0.0, %v897
        %899 = vdwg.mxu0
        %v900 = vxor.u32 %v825, 2147483648
        %v901 = vxor.u32 %v827, 2147483648
        %v902 = vxor.u32 %v896, 2147483648
        %v903 = vxor.u32 %v898, 2147483648
        %v904 = vmul.f32 %v900, 1.442695
        %v905 = vpow.pop %v904
        %v906 = vmul.f32 %v901, 1.442695
        %v907 = vpow.pop %v906
        %v908 = vmul.f32 %v902, 1.442695
        %v909 = vpow.pop %v908
        %v910 = vmul.f32 %v903, 1.442695
        %v911 = vpow.pop %v910
        %v912 = vadd.f32 %v905, 1.0
        %v913 = vadd.f32 %v907, 1.0
        %v914 = vadd.f32 %v909, 1.0
        %v915 = vadd.f32 %v911, 1.0
        %v916 = vrcp.pop %v912
        %v917 = vmul.f32 1.0, %v916
        %v918 = vrcp.pop %v913
        %v919 = vmul.f32 1.0, %v918
        %v920 = vrcp.pop %v914
        %v921 = vmul.f32 1.0, %v920
        %v922 = vrcp.pop %v915
        %v923 = vmul.f32 1.0, %v922
        %v924 = vld [vmem:[#allocation6] sm:$0xff]
        %v925 = vld [vmem:[#allocation6 + $0x8] sm:$0xff]
        %v926 = vld [vmem:[#allocation6 + $0x10] sm:$0xff]
        %v927 = vld [vmem:[#allocation6 + $0x18] sm:$0xff]
        %v928 = vld [vmem:[#allocation6 + $0x20] sm:$0xff]
        %v929 = vld [vmem:[#allocation6 + $0x28] sm:$0xff]
        %v930 = vld [vmem:[#allocation6 + $0x30] sm:$0xff]
        %v931 = vld [vmem:[#allocation6 + $0x38] sm:$0xff]
        %v932 = vld [vmem:[#allocation6 + $0x40] sm:$0xff]
        %v933 = vld [vmem:[#allocation6 + $0x48] sm:$0xff]
        %v934 = vld [vmem:[#allocation6 + $0x50] sm:$0xff]
        %v935 = vld [vmem:[#allocation6 + $0x58] sm:$0xff]
        %v936 = vld [vmem:[#allocation6 + $0x60] sm:$0xff]
        %v937 = vld [vmem:[#allocation6 + $0x68] sm:$0xff]
        %v938 = vld [vmem:[#allocation6 + $0x70] sm:$0xff]
        %v939 = vld [vmem:[#allocation6 + $0x78] sm:$0xff]
        %v940 = vld [vmem:[#allocation6 + $0x80] sm:$0xff]
        %v941 = vld [vmem:[#allocation6 + $0x88] sm:$0xff]
        %v942 = vld [vmem:[#allocation6 + $0x90] sm:$0xff]
        %v943 = vld [vmem:[#allocation6 + $0x98] sm:$0xff]
        %v944 = vld [vmem:[#allocation6 + $0xa0] sm:$0xff]
        %v945 = vld [vmem:[#allocation6 + $0xa8] sm:$0xff]
        %v946 = vld [vmem:[#allocation6 + $0xb0] sm:$0xff]
        %v947 = vld [vmem:[#allocation6 + $0xb8] sm:$0xff]
        %v948 = vld [vmem:[#allocation6 + $0xc0] sm:$0xff]
        %v949 = vld [vmem:[#allocation6 + $0xc8] sm:$0xff]
        %v950 = vld [vmem:[#allocation6 + $0xd0] sm:$0xff]
        %v951 = vld [vmem:[#allocation6 + $0xd8] sm:$0xff]
        %v952 = vld [vmem:[#allocation6 + $0xe0] sm:$0xff]
        %v953 = vld [vmem:[#allocation6 + $0xe8] sm:$0xff]
        %v954 = vld [vmem:[#allocation6 + $0xf0] sm:$0xff]
        %v955 = vld [vmem:[#allocation6 + $0xf8] sm:$0xff]
        %v956 = vld [vmem:[#allocation6 + $0x100] sm:$0xff]
        %v957 = vld [vmem:[#allocation6 + $0x108] sm:$0xff]
        %v958 = vld [vmem:[#allocation6 + $0x110] sm:$0xff]
        %v959 = vld [vmem:[#allocation6 + $0x118] sm:$0xff]
        %v960 = vld [vmem:[#allocation6 + $0x120] sm:$0xff]
        %v961 = vld [vmem:[#allocation6 + $0x128] sm:$0xff]
        %v962 = vld [vmem:[#allocation6 + $0x130] sm:$0xff]
        %v963 = vld [vmem:[#allocation6 + $0x138] sm:$0xff]
        %v964 = vld [vmem:[#allocation6 + $0x140] sm:$0xff]
        %v965 = vld [vmem:[#allocation6 + $0x148] sm:$0xff]
        %v966 = vld [vmem:[#allocation6 + $0x150] sm:$0xff]
        %v967 = vld [vmem:[#allocation6 + $0x158] sm:$0xff]
        %v968 = vld [vmem:[#allocation6 + $0x160] sm:$0xff]
        %v969 = vld [vmem:[#allocation6 + $0x168] sm:$0xff]
        %v970 = vld [vmem:[#allocation6 + $0x170] sm:$0xff]
        %v971 = vld [vmem:[#allocation6 + $0x178] sm:$0xff]
        %v972 = vld [vmem:[#allocation6 + $0x180] sm:$0xff]
        %v973 = vld [vmem:[#allocation6 + $0x188] sm:$0xff]
        %v974 = vld [vmem:[#allocation6 + $0x190] sm:$0xff]
        %v975 = vld [vmem:[#allocation6 + $0x198] sm:$0xff]
        %v976 = vld [vmem:[#allocation6 + $0x1a0] sm:$0xff]
        %v977 = vld [vmem:[#allocation6 + $0x1a8] sm:$0xff]
        %v978 = vld [vmem:[#allocation6 + $0x1b0] sm:$0xff]
        %v979 = vld [vmem:[#allocation6 + $0x1b8] sm:$0xff]
        %v980 = vld [vmem:[#allocation6 + $0x1c0] sm:$0xff]
        %v981 = vld [vmem:[#allocation6 + $0x1c8] sm:$0xff]
        %v982 = vld [vmem:[#allocation6 + $0x1d0] sm:$0xff]
        %v983 = vld [vmem:[#allocation6 + $0x1d8] sm:$0xff]
        %v984 = vld [vmem:[#allocation6 + $0x1e0] sm:$0xff]
        %v985 = vld [vmem:[#allocation6 + $0x1e8] sm:$0xff]
        %v986 = vld [vmem:[#allocation6 + $0x1f0] sm:$0xff]
        %v987 = vld [vmem:[#allocation6 + $0x1f8] sm:$0xff]
        %v988 = vld [vmem:[#allocation6 + $0x200] sm:$0xff]
        %v989 = vld [vmem:[#allocation6 + $0x208] sm:$0xff]
        %v990 = vld [vmem:[#allocation6 + $0x210] sm:$0xff]
        %v991 = vld [vmem:[#allocation6 + $0x218] sm:$0xff]
        %v992 = vld [vmem:[#allocation6 + $0x220] sm:$0xff]
        %v993 = vld [vmem:[#allocation6 + $0x228] sm:$0xff]
        %v994 = vld [vmem:[#allocation6 + $0x230] sm:$0xff]
        %v995 = vld [vmem:[#allocation6 + $0x238] sm:$0xff]
        %v996 = vld [vmem:[#allocation6 + $0x240] sm:$0xff]
        %v997 = vld [vmem:[#allocation6 + $0x248] sm:$0xff]
        %v998 = vld [vmem:[#allocation6 + $0x250] sm:$0xff]
        %v999 = vld [vmem:[#allocation6 + $0x258] sm:$0xff]
        %v1000 = vld [vmem:[#allocation6 + $0x260] sm:$0xff]
        %v1001 = vld [vmem:[#allocation6 + $0x268] sm:$0xff]
        %v1002 = vld [vmem:[#allocation6 + $0x270] sm:$0xff]
        %v1003 = vld [vmem:[#allocation6 + $0x278] sm:$0xff]
        %v1004 = vld [vmem:[#allocation6 + $0x280] sm:$0xff]
        %v1005 = vld [vmem:[#allocation6 + $0x288] sm:$0xff]
        %v1006 = vld [vmem:[#allocation6 + $0x290] sm:$0xff]
        %v1007 = vld [vmem:[#allocation6 + $0x298] sm:$0xff]
        %v1008 = vld [vmem:[#allocation6 + $0x2a0] sm:$0xff]
        %v1009 = vld [vmem:[#allocation6 + $0x2a8] sm:$0xff]
        %v1010 = vld [vmem:[#allocation6 + $0x2b0] sm:$0xff]
        %v1011 = vld [vmem:[#allocation6 + $0x2b8] sm:$0xff]
        %v1012 = vld [vmem:[#allocation6 + $0x2c0] sm:$0xff]
        %v1013 = vld [vmem:[#allocation6 + $0x2c8] sm:$0xff]
        %v1014 = vld [vmem:[#allocation6 + $0x2d0] sm:$0xff]
        %v1015 = vld [vmem:[#allocation6 + $0x2d8] sm:$0xff]
        %v1016 = vld [vmem:[#allocation6 + $0x2e0] sm:$0xff]
        %v1017 = vld [vmem:[#allocation6 + $0x2e8] sm:$0xff]
        %v1018 = vld [vmem:[#allocation6 + $0x2f0] sm:$0xff]
        %v1019 = vld [vmem:[#allocation6 + $0x2f8] sm:$0xff]
        %v1020 = vld [vmem:[#allocation6 + $0x300] sm:$0xff]
        %v1021 = vld [vmem:[#allocation6 + $0x308] sm:$0xff]
        %v1022 = vld [vmem:[#allocation6 + $0x310] sm:$0xff]
        %v1023 = vld [vmem:[#allocation6 + $0x318] sm:$0xff]
        %v1024 = vld [vmem:[#allocation6 + $0x320] sm:$0xff]
        %v1025 = vld [vmem:[#allocation6 + $0x328] sm:$0xff]
        %v1026 = vld [vmem:[#allocation6 + $0x330] sm:$0xff]
        %v1027 = vld [vmem:[#allocation6 + $0x338] sm:$0xff]
        %v1028 = vld [vmem:[#allocation6 + $0x340] sm:$0xff]
        %v1029 = vld [vmem:[#allocation6 + $0x348] sm:$0xff]
        %v1030 = vld [vmem:[#allocation6 + $0x350] sm:$0xff]
        %v1031 = vld [vmem:[#allocation6 + $0x358] sm:$0xff]
        %v1032 = vld [vmem:[#allocation6 + $0x360] sm:$0xff]
        %v1033 = vld [vmem:[#allocation6 + $0x368] sm:$0xff]
        %v1034 = vld [vmem:[#allocation6 + $0x370] sm:$0xff]
        %v1035 = vld [vmem:[#allocation6 + $0x378] sm:$0xff]
        %v1036 = vld [vmem:[#allocation6 + $0x380] sm:$0xff]
        %v1037 = vld [vmem:[#allocation6 + $0x388] sm:$0xff]
        %v1038 = vld [vmem:[#allocation6 + $0x390] sm:$0xff]
        %v1039 = vld [vmem:[#allocation6 + $0x398] sm:$0xff]
        %v1040 = vld [vmem:[#allocation6 + $0x3a0] sm:$0xff]
        %v1041 = vld [vmem:[#allocation6 + $0x3a8] sm:$0xff]
        %v1042 = vld [vmem:[#allocation6 + $0x3b0] sm:$0xff]
        %v1043 = vld [vmem:[#allocation6 + $0x3b8] sm:$0xff]
        %v1044 = vld [vmem:[#allocation6 + $0x3c0] sm:$0xff]
        %v1045 = vld [vmem:[#allocation6 + $0x3c8] sm:$0xff]
        %v1046 = vld [vmem:[#allocation6 + $0x3d0] sm:$0xff]
        %v1047 = vld [vmem:[#allocation6 + $0x3d8] sm:$0xff]
        %v1048 = vld [vmem:[#allocation6 + $0x3e0] sm:$0xff]
        %v1049 = vld [vmem:[#allocation6 + $0x3e8] sm:$0xff]
        %v1050 = vld [vmem:[#allocation6 + $0x3f0] sm:$0xff]
        %v1051 = vld [vmem:[#allocation6 + $0x3f8] sm:$0xff]
        %v1052 = vld [vmem:[#allocation6 + $0x400] sm:$0xff]
        %v1053 = vld [vmem:[#allocation6 + $0x408] sm:$0xff]
        %v1054 = vld [vmem:[#allocation6 + $0x410] sm:$0xff]
        %v1055 = vld [vmem:[#allocation6 + $0x418] sm:$0xff]
        %v1056 = vld [vmem:[#allocation6 + $0x420] sm:$0xff]
        %v1057 = vld [vmem:[#allocation6 + $0x428] sm:$0xff]
        %v1058 = vld [vmem:[#allocation6 + $0x430] sm:$0xff]
        %v1059 = vld [vmem:[#allocation6 + $0x438] sm:$0xff]
        %v1060 = vld [vmem:[#allocation6 + $0x440] sm:$0xff]
        %v1061 = vld [vmem:[#allocation6 + $0x448] sm:$0xff]
        %v1062 = vld [vmem:[#allocation6 + $0x450] sm:$0xff]
        %v1063 = vld [vmem:[#allocation6 + $0x458] sm:$0xff]
        %v1064 = vld [vmem:[#allocation6 + $0x460] sm:$0xff]
        %v1065 = vld [vmem:[#allocation6 + $0x468] sm:$0xff]
        %v1066 = vld [vmem:[#allocation6 + $0x470] sm:$0xff]
        %v1067 = vld [vmem:[#allocation6 + $0x478] sm:$0xff]
        %v1068 = vld [vmem:[#allocation6 + $0x480] sm:$0xff]
        %v1069 = vld [vmem:[#allocation6 + $0x488] sm:$0xff]
        %v1070 = vld [vmem:[#allocation6 + $0x490] sm:$0xff]
        %v1071 = vld [vmem:[#allocation6 + $0x498] sm:$0xff]
        %v1072 = vld [vmem:[#allocation6 + $0x4a0] sm:$0xff]
        %v1073 = vld [vmem:[#allocation6 + $0x4a8] sm:$0xff]
        %v1074 = vld [vmem:[#allocation6 + $0x4b0] sm:$0xff]
        %v1075 = vld [vmem:[#allocation6 + $0x4b8] sm:$0xff]
        %v1076 = vld [vmem:[#allocation6 + $0x4c0] sm:$0xff]
        %v1077 = vld [vmem:[#allocation6 + $0x4c8] sm:$0xff]
        %v1078 = vld [vmem:[#allocation6 + $0x4d0] sm:$0xff]
        %v1079 = vld [vmem:[#allocation6 + $0x4d8] sm:$0xff]
        %v1080 = vld [vmem:[#allocation6 + $0x4e0] sm:$0xff]
        %v1081 = vld [vmem:[#allocation6 + $0x4e8] sm:$0xff]
        %v1082 = vld [vmem:[#allocation6 + $0x4f0] sm:$0xff]
        %v1083 = vld [vmem:[#allocation6 + $0x4f8] sm:$0xff]
        %v1084 = vld [vmem:[#allocation6 + $0x500] sm:$0xff]
        %v1085 = vld [vmem:[#allocation6 + $0x508] sm:$0xff]
        %v1086 = vld [vmem:[#allocation6 + $0x510] sm:$0xff]
        %v1087 = vld [vmem:[#allocation6 + $0x518] sm:$0xff]
        %v1088 = vld [vmem:[#allocation6 + $0x520] sm:$0xff]
        %v1089 = vld [vmem:[#allocation6 + $0x528] sm:$0xff]
        %v1090 = vld [vmem:[#allocation6 + $0x530] sm:$0xff]
        %v1091 = vld [vmem:[#allocation6 + $0x538] sm:$0xff]
        %v1092 = vld [vmem:[#allocation6 + $0x540] sm:$0xff]
        %v1093 = vld [vmem:[#allocation6 + $0x548] sm:$0xff]
        %v1094 = vld [vmem:[#allocation6 + $0x550] sm:$0xff]
        %v1095 = vld [vmem:[#allocation6 + $0x558] sm:$0xff]
        %v1096 = vld [vmem:[#allocation6 + $0x560] sm:$0xff]
        %v1097 = vld [vmem:[#allocation6 + $0x568] sm:$0xff]
        %v1098 = vld [vmem:[#allocation6 + $0x570] sm:$0xff]
        %v1099 = vld [vmem:[#allocation6 + $0x578] sm:$0xff]
        %v1100 = vld [vmem:[#allocation6 + $0x580] sm:$0xff]
        %v1101 = vld [vmem:[#allocation6 + $0x588] sm:$0xff]
        %v1102 = vld [vmem:[#allocation6 + $0x590] sm:$0xff]
        %v1103 = vld [vmem:[#allocation6 + $0x598] sm:$0xff]
        %v1104 = vld [vmem:[#allocation6 + $0x5a0] sm:$0xff]
        %v1105 = vld [vmem:[#allocation6 + $0x5a8] sm:$0xff]
        %v1106 = vld [vmem:[#allocation6 + $0x5b0] sm:$0xff]
        %v1107 = vld [vmem:[#allocation6 + $0x5b8] sm:$0xff]
        %v1108 = vld [vmem:[#allocation6 + $0x5c0] sm:$0xff]
        %v1109 = vld [vmem:[#allocation6 + $0x5c8] sm:$0xff]
        %v1110 = vld [vmem:[#allocation6 + $0x5d0] sm:$0xff]
        %v1111 = vld [vmem:[#allocation6 + $0x5d8] sm:$0xff]
        %v1112 = vld [vmem:[#allocation6 + $0x5e0] sm:$0xff]
        %v1113 = vld [vmem:[#allocation6 + $0x5e8] sm:$0xff]
        %v1114 = vld [vmem:[#allocation6 + $0x5f0] sm:$0xff]
        %v1115 = vld [vmem:[#allocation6 + $0x5f8] sm:$0xff]
        %v1116 = vld [vmem:[#allocation6 + $0x600] sm:$0xff]
        %v1117 = vld [vmem:[#allocation6 + $0x608] sm:$0xff]
        %v1118 = vld [vmem:[#allocation6 + $0x610] sm:$0xff]
        %v1119 = vld [vmem:[#allocation6 + $0x618] sm:$0xff]
        %v1120 = vld [vmem:[#allocation6 + $0x620] sm:$0xff]
        %v1121 = vld [vmem:[#allocation6 + $0x628] sm:$0xff]
        %v1122 = vld [vmem:[#allocation6 + $0x630] sm:$0xff]
        %v1123 = vld [vmem:[#allocation6 + $0x638] sm:$0xff]
        %v1124 = vld [vmem:[#allocation6 + $0x640] sm:$0xff]
        %v1125 = vld [vmem:[#allocation6 + $0x648] sm:$0xff]
        %v1126 = vld [vmem:[#allocation6 + $0x650] sm:$0xff]
        %v1127 = vld [vmem:[#allocation6 + $0x658] sm:$0xff]
        %v1128 = vld [vmem:[#allocation6 + $0x660] sm:$0xff]
        %v1129 = vld [vmem:[#allocation6 + $0x668] sm:$0xff]
        %v1130 = vld [vmem:[#allocation6 + $0x670] sm:$0xff]
        %v1131 = vld [vmem:[#allocation6 + $0x678] sm:$0xff]
        %v1132 = vld [vmem:[#allocation6 + $0x680] sm:$0xff]
        %v1133 = vld [vmem:[#allocation6 + $0x688] sm:$0xff]
        %v1134 = vld [vmem:[#allocation6 + $0x690] sm:$0xff]
        %v1135 = vld [vmem:[#allocation6 + $0x698] sm:$0xff]
        %v1136 = vld [vmem:[#allocation6 + $0x6a0] sm:$0xff]
        %v1137 = vld [vmem:[#allocation6 + $0x6a8] sm:$0xff]
        %v1138 = vld [vmem:[#allocation6 + $0x6b0] sm:$0xff]
        %v1139 = vld [vmem:[#allocation6 + $0x6b8] sm:$0xff]
        %v1140 = vld [vmem:[#allocation6 + $0x6c0] sm:$0xff]
        %v1141 = vld [vmem:[#allocation6 + $0x6c8] sm:$0xff]
        %v1142 = vld [vmem:[#allocation6 + $0x6d0] sm:$0xff]
        %v1143 = vld [vmem:[#allocation6 + $0x6d8] sm:$0xff]
        %v1144 = vld [vmem:[#allocation6 + $0x6e0] sm:$0xff]
        %v1145 = vld [vmem:[#allocation6 + $0x6e8] sm:$0xff]
        %v1146 = vld [vmem:[#allocation6 + $0x6f0] sm:$0xff]
        %v1147 = vld [vmem:[#allocation6 + $0x6f8] sm:$0xff]
        %v1148 = vld [vmem:[#allocation6 + $0x700] sm:$0xff]
        %v1149 = vld [vmem:[#allocation6 + $0x708] sm:$0xff]
        %v1150 = vld [vmem:[#allocation6 + $0x710] sm:$0xff]
        %v1151 = vld [vmem:[#allocation6 + $0x718] sm:$0xff]
        %v1152 = vld [vmem:[#allocation6 + $0x720] sm:$0xff]
        %v1153 = vld [vmem:[#allocation6 + $0x728] sm:$0xff]
        %v1154 = vld [vmem:[#allocation6 + $0x730] sm:$0xff]
        %v1155 = vld [vmem:[#allocation6 + $0x738] sm:$0xff]
        %v1156 = vld [vmem:[#allocation6 + $0x740] sm:$0xff]
        %v1157 = vld [vmem:[#allocation6 + $0x748] sm:$0xff]
        %v1158 = vld [vmem:[#allocation6 + $0x750] sm:$0xff]
        %v1159 = vld [vmem:[#allocation6 + $0x758] sm:$0xff]
        %v1160 = vld [vmem:[#allocation6 + $0x760] sm:$0xff]
        %v1161 = vld [vmem:[#allocation6 + $0x768] sm:$0xff]
        %v1162 = vld [vmem:[#allocation6 + $0x770] sm:$0xff]
        %v1163 = vld [vmem:[#allocation6 + $0x778] sm:$0xff]
        %v1164 = vld [vmem:[#allocation6 + $0x780] sm:$0xff]
        %v1165 = vld [vmem:[#allocation6 + $0x788] sm:$0xff]
        %v1166 = vld [vmem:[#allocation6 + $0x790] sm:$0xff]
        %v1167 = vld [vmem:[#allocation6 + $0x798] sm:$0xff]
        %v1168 = vld [vmem:[#allocation6 + $0x7a0] sm:$0xff]
        %v1169 = vld [vmem:[#allocation6 + $0x7a8] sm:$0xff]
        %v1170 = vld [vmem:[#allocation6 + $0x7b0] sm:$0xff]
        %v1171 = vld [vmem:[#allocation6 + $0x7b8] sm:$0xff]
        %v1172 = vld [vmem:[#allocation6 + $0x7c0] sm:$0xff]
        %v1173 = vld [vmem:[#allocation6 + $0x7c8] sm:$0xff]
        %v1174 = vld [vmem:[#allocation6 + $0x7d0] sm:$0xff]
        %v1175 = vld [vmem:[#allocation6 + $0x7d8] sm:$0xff]
        %v1176 = vld [vmem:[#allocation6 + $0x7e0] sm:$0xff]
        %v1177 = vld [vmem:[#allocation6 + $0x7e8] sm:$0xff]
        %v1178 = vld [vmem:[#allocation6 + $0x7f0] sm:$0xff]
        %v1179 = vld [vmem:[#allocation6 + $0x7f8] sm:$0xff]
        %1180 = vmatprep.subr.mxu0 %v925
        %1181 = vmatpush1.msra.mxu0 %v924
        %1182 = vmatprep.subr.mxu0 %v929
        %1183 = vmatpush1.msra.mxu0 %v928
        %1184 = vmatprep.subr.mxu0 %v933
        %1185 = vmatpush1.msra.mxu0 %v932
        %1186 = vmatprep.subr.mxu0 %v937
        %1187 = vmatpush1.msra.mxu0 %v936
        %1188 = vmatprep.subr.mxu0 %v941
        %1189 = vmatpush1.msra.mxu0 %v940
        %1190 = vmatprep.subr.mxu0 %v945
        %1191 = vmatpush1.msra.mxu0 %v944
        %1192 = vmatprep.subr.mxu0 %v949
        %1193 = vmatpush1.msra.mxu0 %v948
        %1194 = vmatprep.subr.mxu0 %v953
        %1195 = vmatpush1.msra.mxu0 %v952
        %1196 = vmatprep.subr.mxu0 %v957
        %1197 = vmatpush1.msra.mxu0 %v956
        %1198 = vmatprep.subr.mxu0 %v961
        %1199 = vmatpush1.msra.mxu0 %v960
        %1200 = vmatprep.subr.mxu0 %v965
        %1201 = vmatpush1.msra.mxu0 %v964
        %1202 = vmatprep.subr.mxu0 %v969
        %1203 = vmatpush1.msra.mxu0 %v968
        %1204 = vmatprep.subr.mxu0 %v973
        %1205 = vmatpush1.msra.mxu0 %v972
        %1206 = vmatprep.subr.mxu0 %v977
        %1207 = vmatpush1.msra.mxu0 %v976
        %1208 = vmatprep.subr.mxu0 %v981
        %1209 = vmatpush1.msra.mxu0 %v980
        %1210 = vmatprep.subr.mxu0 %v985
        %1211 = vmatpush1.msra.mxu0 %v984
        %1212 = vmatprep.subr.mxu0 %v989
        %1213 = vmatpush1.msra.mxu0 %v988
        %1214 = vmatprep.subr.mxu0 %v993
        %1215 = vmatpush1.msra.mxu0 %v992
        %1216 = vmatprep.subr.mxu0 %v997
        %1217 = vmatpush1.msra.mxu0 %v996
        %1218 = vmatprep.subr.mxu0 %v1001
        %1219 = vmatpush1.msra.mxu0 %v1000
        %1220 = vmatprep.subr.mxu0 %v1005
        %1221 = vmatpush1.msra.mxu0 %v1004
        %1222 = vmatprep.subr.mxu0 %v1009
        %1223 = vmatpush1.msra.mxu0 %v1008
        %1224 = vmatprep.subr.mxu0 %v1013
        %1225 = vmatpush1.msra.mxu0 %v1012
        %1226 = vmatprep.subr.mxu0 %v1017
        %1227 = vmatpush1.msra.mxu0 %v1016
        %1228 = vmatprep.subr.mxu0 %v1021
        %1229 = vmatpush1.msra.mxu0 %v1020
        %1230 = vmatprep.subr.mxu0 %v1025
        %1231 = vmatpush1.msra.mxu0 %v1024
        %1232 = vmatprep.subr.mxu0 %v1029
        %1233 = vmatpush1.msra.mxu0 %v1028
        %1234 = vmatprep.subr.mxu0 %v1033
        %1235 = vmatpush1.msra.mxu0 %v1032
        %1236 = vmatprep.subr.mxu0 %v1037
        %1237 = vmatpush1.msra.mxu0 %v1036
        %1238 = vmatprep.subr.mxu0 %v1041
        %1239 = vmatpush1.msra.mxu0 %v1040
        %1240 = vmatprep.subr.mxu0 %v1045
        %1241 = vmatpush1.msra.mxu0 %v1044
        %1242 = vmatprep.subr.mxu0 %v1049
        %1243 = vmatpush1.msra.mxu0 %v1048
        %1244 = vmatprep.mubr.f32.mxu0 %v919
        %1245 = vmatmul.mubr.f32.gmra.mrb[0].mxu0 %v917
        %v1246 = vpop.f32.mrb[0].mxu0
        %v1247 = vadd.f32 0.0, %v1246
        %v1248 = vpop.f32.mrb[0].mxu0
        %v1249 = vadd.f32 0.0, %v1248
        %1250 = vdwg.mxu0
        %1251 = vmatprep.subr.mxu0 %v1053
        %1252 = vmatpush1.msra.mxu0 %v1052
        %1253 = vmatprep.subr.mxu0 %v1057
        %1254 = vmatpush1.msra.mxu0 %v1056
        %1255 = vmatprep.subr.mxu0 %v1061
        %1256 = vmatpush1.msra.mxu0 %v1060
        %1257 = vmatprep.subr.mxu0 %v1065
        %1258 = vmatpush1.msra.mxu0 %v1064
        %1259 = vmatprep.subr.mxu0 %v1069
        %1260 = vmatpush1.msra.mxu0 %v1068
        %1261 = vmatprep.subr.mxu0 %v1073
        %1262 = vmatpush1.msra.mxu0 %v1072
        %1263 = vmatprep.subr.mxu0 %v1077
        %1264 = vmatpush1.msra.mxu0 %v1076
        %1265 = vmatprep.subr.mxu0 %v1081
        %1266 = vmatpush1.msra.mxu0 %v1080
        %1267 = vmatprep.subr.mxu0 %v1085
        %1268 = vmatpush1.msra.mxu0 %v1084
        %1269 = vmatprep.subr.mxu0 %v1089
        %1270 = vmatpush1.msra.mxu0 %v1088
        %1271 = vmatprep.subr.mxu0 %v1093
        %1272 = vmatpush1.msra.mxu0 %v1092
        %1273 = vmatprep.subr.mxu0 %v1097
        %1274 = vmatpush1.msra.mxu0 %v1096
        %1275 = vmatprep.subr.mxu0 %v1101
        %1276 = vmatpush1.msra.mxu0 %v1100
        %1277 = vmatprep.subr.mxu0 %v1105
        %1278 = vmatpush1.msra.mxu0 %v1104
        %1279 = vmatprep.subr.mxu0 %v1109
        %1280 = vmatpush1.msra.mxu0 %v1108
        %1281 = vmatprep.subr.mxu0 %v1113
        %1282 = vmatpush1.msra.mxu0 %v1112
        %1283 = vmatprep.subr.mxu0 %v1117
        %1284 = vmatpush1.msra.mxu0 %v1116
        %1285 = vmatprep.subr.mxu0 %v1121
        %1286 = vmatpush1.msra.mxu0 %v1120
        %1287 = vmatprep.subr.mxu0 %v1125
        %1288 = vmatpush1.msra.mxu0 %v1124
        %1289 = vmatprep.subr.mxu0 %v1129
        %1290 = vmatpush1.msra.mxu0 %v1128
        %1291 = vmatprep.subr.mxu0 %v1133
        %1292 = vmatpush1.msra.mxu0 %v1132
        %1293 = vmatprep.subr.mxu0 %v1137
        %1294 = vmatpush1.msra.mxu0 %v1136
        %1295 = vmatprep.subr.mxu0 %v1141
        %1296 = vmatpush1.msra.mxu0 %v1140
        %1297 = vmatprep.subr.mxu0 %v1145
        %1298 = vmatpush1.msra.mxu0 %v1144
        %1299 = vmatprep.subr.mxu0 %v1149
        %1300 = vmatpush1.msra.mxu0 %v1148
        %1301 = vmatprep.subr.mxu0 %v1153
        %1302 = vmatpush1.msra.mxu0 %v1152
        %1303 = vmatprep.subr.mxu0 %v1157
        %1304 = vmatpush1.msra.mxu0 %v1156
        %1305 = vmatprep.subr.mxu0 %v1161
        %1306 = vmatpush1.msra.mxu0 %v1160
        %1307 = vmatprep.subr.mxu0 %v1165
        %1308 = vmatpush1.msra.mxu0 %v1164
        %1309 = vmatprep.subr.mxu0 %v1169
        %1310 = vmatpush1.msra.mxu0 %v1168
        %1311 = vmatprep.subr.mxu0 %v1173
        %1312 = vmatpush1.msra.mxu0 %v1172
        %1313 = vmatprep.subr.mxu0 %v1177
        %1314 = vmatpush1.msra.mxu0 %v1176
        %1315 = vmatprep.mubr.f32.mxu0 %v923
        %1316 = vmatmul.mubr.f32.gmra.mrb[0].mxu0 %v921
        %v1317 = vpop.f32.mrb[0].mxu0
        %v1318 = vadd.f32 %v1247, %v1317
        %v1319 = vpop.f32.mrb[0].mxu0
        %v1320 = vadd.f32 %v1249, %v1319
        %1321 = vdwg.mxu0
        %1322 = vmatprep.subr.mxu0 %v927
        %1323 = vmatpush1.msra.mxu0 %v926
        %1324 = vmatprep.subr.mxu0 %v931
        %1325 = vmatpush1.msra.mxu0 %v930
        %1326 = vmatprep.subr.mxu0 %v935
        %1327 = vmatpush1.msra.mxu0 %v934
        %1328 = vmatprep.subr.mxu0 %v939
        %1329 = vmatpush1.msra.mxu0 %v938
        %1330 = vmatprep.subr.mxu0 %v943
        %1331 = vmatpush1.msra.mxu0 %v942
        %1332 = vmatprep.subr.mxu0 %v947
        %1333 = vmatpush1.msra.mxu0 %v946
        %1334 = vmatprep.subr.mxu0 %v951
        %1335 = vmatpush1.msra.mxu0 %v950
        %1336 = vmatprep.subr.mxu0 %v955
        %1337 = vmatpush1.msra.mxu0 %v954
        %1338 = vmatprep.subr.mxu0 %v959
        %1339 = vmatpush1.msra.mxu0 %v958
        %1340 = vmatprep.subr.mxu0 %v963
        %1341 = vmatpush1.msra.mxu0 %v962
        %1342 = vmatprep.subr.mxu0 %v967
        %1343 = vmatpush1.msra.mxu0 %v966
        %1344 = vmatprep.subr.mxu0 %v971
        %1345 = vmatpush1.msra.mxu0 %v970
        %1346 = vmatprep.subr.mxu0 %v975
        %1347 = vmatpush1.msra.mxu0 %v974
        %1348 = vmatprep.subr.mxu0 %v979
        %1349 = vmatpush1.msra.mxu0 %v978
        %1350 = vmatprep.subr.mxu0 %v983
        %1351 = vmatpush1.msra.mxu0 %v982
        %1352 = vmatprep.subr.mxu0 %v987
        %1353 = vmatpush1.msra.mxu0 %v986
        %1354 = vmatprep.subr.mxu0 %v991
        %1355 = vmatpush1.msra.mxu0 %v990
        %1356 = vmatprep.subr.mxu0 %v995
        %1357 = vmatpush1.msra.mxu0 %v994
        %1358 = vmatprep.subr.mxu0 %v999
        %1359 = vmatpush1.msra.mxu0 %v998
        %1360 = vmatprep.subr.mxu0 %v1003
        %1361 = vmatpush1.msra.mxu0 %v1002
        %1362 = vmatprep.subr.mxu0 %v1007
        %1363 = vmatpush1.msra.mxu0 %v1006
        %1364 = vmatprep.subr.mxu0 %v1011
        %1365 = vmatpush1.msra.mxu0 %v1010
        %1366 = vmatprep.subr.mxu0 %v1015
        %1367 = vmatpush1.msra.mxu0 %v1014
        %1368 = vmatprep.subr.mxu0 %v1019
        %1369 = vmatpush1.msra.mxu0 %v1018
        %1370 = vmatprep.subr.mxu0 %v1023
        %1371 = vmatpush1.msra.mxu0 %v1022
        %1372 = vmatprep.subr.mxu0 %v1027
        %1373 = vmatpush1.msra.mxu0 %v1026
        %1374 = vmatprep.subr.mxu0 %v1031
        %1375 = vmatpush1.msra.mxu0 %v1030
        %1376 = vmatprep.subr.mxu0 %v1035
        %1377 = vmatpush1.msra.mxu0 %v1034
        %1378 = vmatprep.subr.mxu0 %v1039
        %1379 = vmatpush1.msra.mxu0 %v1038
        %1380 = vmatprep.subr.mxu0 %v1043
        %1381 = vmatpush1.msra.mxu0 %v1042
        %1382 = vmatprep.subr.mxu0 %v1047
        %1383 = vmatpush1.msra.mxu0 %v1046
        %1384 = vmatprep.subr.mxu0 %v1051
        %1385 = vmatpush1.msra.mxu0 %v1050
        %1386 = vmatprep.mubr.f32.mxu0 %v919
        %1387 = vmatmul.mubr.f32.gmra.mrb[0].mxu0 %v917
        %v1388 = vpop.f32.mrb[0].mxu0
        %v1389 = vadd.f32 0.0, %v1388
        %v1390 = vpop.f32.mrb[0].mxu0
        %v1391 = vadd.f32 0.0, %v1390
        %1392 = vdwg.mxu0
        %1393 = vmatprep.subr.mxu0 %v1055
        %1394 = vmatpush1.msra.mxu0 %v1054
        %1395 = vmatprep.subr.mxu0 %v1059
        %1396 = vmatpush1.msra.mxu0 %v1058
        %1397 = vmatprep.subr.mxu0 %v1063
        %1398 = vmatpush1.msra.mxu0 %v1062
        %1399 = vmatprep.subr.mxu0 %v1067
        %1400 = vmatpush1.msra.mxu0 %v1066
        %1401 = vmatprep.subr.mxu0 %v1071
        %1402 = vmatpush1.msra.mxu0 %v1070
        %1403 = vmatprep.subr.mxu0 %v1075
        %1404 = vmatpush1.msra.mxu0 %v1074
        %1405 = vmatprep.subr.mxu0 %v1079
        %1406 = vmatpush1.msra.mxu0 %v1078
        %1407 = vmatprep.subr.mxu0 %v1083
        %1408 = vmatpush1.msra.mxu0 %v1082
        %1409 = vmatprep.subr.mxu0 %v1087
        %1410 = vmatpush1.msra.mxu0 %v1086
        %1411 = vmatprep.subr.mxu0 %v1091
        %1412 = vmatpush1.msra.mxu0 %v1090
        %1413 = vmatprep.subr.mxu0 %v1095
        %1414 = vmatpush1.msra.mxu0 %v1094
        %1415 = vmatprep.subr.mxu0 %v1099
        %1416 = vmatpush1.msra.mxu0 %v1098
        %1417 = vmatprep.subr.mxu0 %v1103
        %1418 = vmatpush1.msra.mxu0 %v1102
        %1419 = vmatprep.subr.mxu0 %v1107
        %1420 = vmatpush1.msra.mxu0 %v1106
        %1421 = vmatprep.subr.mxu0 %v1111
        %1422 = vmatpush1.msra.mxu0 %v1110
        %1423 = vmatprep.subr.mxu0 %v1115
        %1424 = vmatpush1.msra.mxu0 %v1114
        %1425 = vmatprep.subr.mxu0 %v1119
        %1426 = vmatpush1.msra.mxu0 %v1118
        %1427 = vmatprep.subr.mxu0 %v1123
        %1428 = vmatpush1.msra.mxu0 %v1122
        %1429 = vmatprep.subr.mxu0 %v1127
        %1430 = vmatpush1.msra.mxu0 %v1126
        %1431 = vmatprep.subr.mxu0 %v1131
        %1432 = vmatpush1.msra.mxu0 %v1130
        %1433 = vmatprep.subr.mxu0 %v1135
        %1434 = vmatpush1.msra.mxu0 %v1134
        %1435 = vmatprep.subr.mxu0 %v1139
        %1436 = vmatpush1.msra.mxu0 %v1138
        %1437 = vmatprep.subr.mxu0 %v1143
        %1438 = vmatpush1.msra.mxu0 %v1142
        %1439 = vmatprep.subr.mxu0 %v1147
        %1440 = vmatpush1.msra.mxu0 %v1146
        %1441 = vmatprep.subr.mxu0 %v1151
        %1442 = vmatpush1.msra.mxu0 %v1150
        %1443 = vmatprep.subr.mxu0 %v1155
        %1444 = vmatpush1.msra.mxu0 %v1154
        %1445 = vmatprep.subr.mxu0 %v1159
        %1446 = vmatpush1.msra.mxu0 %v1158
        %1447 = vmatprep.subr.mxu0 %v1163
        %1448 = vmatpush1.msra.mxu0 %v1162
        %1449 = vmatprep.subr.mxu0 %v1167
        %1450 = vmatpush1.msra.mxu0 %v1166
        %1451 = vmatprep.subr.mxu0 %v1171
        %1452 = vmatpush1.msra.mxu0 %v1170
        %1453 = vmatprep.subr.mxu0 %v1175
        %1454 = vmatpush1.msra.mxu0 %v1174
        %1455 = vmatprep.subr.mxu0 %v1179
        %1456 = vmatpush1.msra.mxu0 %v1178
        %1457 = vmatprep.mubr.f32.mxu0 %v923
        %1458 = vmatmul.mubr.f32.gmra.mrb[0].mxu0 %v921
        %v1459 = vpop.f32.mrb[0].mxu0
        %v1460 = vadd.f32 %v1389, %v1459
        %v1461 = vpop.f32.mrb[0].mxu0
        %v1462 = vadd.f32 %v1391, %v1461
        %1463 = vdwg.mxu0
        %v1464 = vmul.f32 %v1318, %v1318
        %v1465 = vmul.f32 %v1320, %v1320
        %v1466 = vmul.f32 %v1460, %v1460
        %v1467 = vmul.f32 %v1462, %v1462
        %v1468 = vld [vmem:[#allocation7] sm:$0xff]
        %v1469 = vld [vmem:[#allocation7 + $0x8] sm:$0xff]
        %v1470 = vld [vmem:[#allocation7 + $0x10] sm:$0xff]
        %v1471 = vld [vmem:[#allocation7 + $0x18] sm:$0xff]
        %v1472 = vld [vmem:[#allocation7 + $0x20] sm:$0xff]
        %v1473 = vld [vmem:[#allocation7 + $0x28] sm:$0xff]
        %v1474 = vld [vmem:[#allocation7 + $0x30] sm:$0xff]
        %v1475 = vld [vmem:[#allocation7 + $0x38] sm:$0xff]
        %v1476 = vld [vmem:[#allocation7 + $0x40] sm:$0xff]
        %v1477 = vld [vmem:[#allocation7 + $0x48] sm:$0xff]
        %v1478 = vld [vmem:[#allocation7 + $0x50] sm:$0xff]
        %v1479 = vld [vmem:[#allocation7 + $0x58] sm:$0xff]
        %v1480 = vld [vmem:[#allocation7 + $0x60] sm:$0xff]
        %v1481 = vld [vmem:[#allocation7 + $0x68] sm:$0xff]
        %v1482 = vld [vmem:[#allocation7 + $0x70] sm:$0xff]
        %v1483 = vld [vmem:[#allocation7 + $0x78] sm:$0xff]
        %v1484 = vld [vmem:[#allocation7 + $0x80] sm:$0xff]
        %v1485 = vld [vmem:[#allocation7 + $0x88] sm:$0xff]
        %v1486 = vld [vmem:[#allocation7 + $0x90] sm:$0xff]
        %v1487 = vld [vmem:[#allocation7 + $0x98] sm:$0xff]
        %v1488 = vld [vmem:[#allocation7 + $0xa0] sm:$0xff]
        %v1489 = vld [vmem:[#allocation7 + $0xa8] sm:$0xff]
        %v1490 = vld [vmem:[#allocation7 + $0xb0] sm:$0xff]
        %v1491 = vld [vmem:[#allocation7 + $0xb8] sm:$0xff]
        %v1492 = vld [vmem:[#allocation7 + $0xc0] sm:$0xff]
        %v1493 = vld [vmem:[#allocation7 + $0xc8] sm:$0xff]
        %v1494 = vld [vmem:[#allocation7 + $0xd0] sm:$0xff]
        %v1495 = vld [vmem:[#allocation7 + $0xd8] sm:$0xff]
        %v1496 = vld [vmem:[#allocation7 + $0xe0] sm:$0xff]
        %v1497 = vld [vmem:[#allocation7 + $0xe8] sm:$0xff]
        %v1498 = vld [vmem:[#allocation7 + $0xf0] sm:$0xff]
        %v1499 = vld [vmem:[#allocation7 + $0xf8] sm:$0xff]
        %v1500 = vld [vmem:[#allocation7 + $0x100] sm:$0xff]
        %v1501 = vld [vmem:[#allocation7 + $0x108] sm:$0xff]
        %v1502 = vld [vmem:[#allocation7 + $0x110] sm:$0xff]
        %v1503 = vld [vmem:[#allocation7 + $0x118] sm:$0xff]
        %v1504 = vld [vmem:[#allocation7 + $0x120] sm:$0xff]
        %v1505 = vld [vmem:[#allocation7 + $0x128] sm:$0xff]
        %v1506 = vld [vmem:[#allocation7 + $0x130] sm:$0xff]
        %v1507 = vld [vmem:[#allocation7 + $0x138] sm:$0xff]
        %v1508 = vld [vmem:[#allocation7 + $0x140] sm:$0xff]
        %v1509 = vld [vmem:[#allocation7 + $0x148] sm:$0xff]
        %v1510 = vld [vmem:[#allocation7 + $0x150] sm:$0xff]
        %v1511 = vld [vmem:[#allocation7 + $0x158] sm:$0xff]
        %v1512 = vld [vmem:[#allocation7 + $0x160] sm:$0xff]
        %v1513 = vld [vmem:[#allocation7 + $0x168] sm:$0xff]
        %v1514 = vld [vmem:[#allocation7 + $0x170] sm:$0xff]
        %v1515 = vld [vmem:[#allocation7 + $0x178] sm:$0xff]
        %v1516 = vld [vmem:[#allocation7 + $0x180] sm:$0xff]
        %v1517 = vld [vmem:[#allocation7 + $0x188] sm:$0xff]
        %v1518 = vld [vmem:[#allocation7 + $0x190] sm:$0xff]
        %v1519 = vld [vmem:[#allocation7 + $0x198] sm:$0xff]
        %v1520 = vld [vmem:[#allocation7 + $0x1a0] sm:$0xff]
        %v1521 = vld [vmem:[#allocation7 + $0x1a8] sm:$0xff]
        %v1522 = vld [vmem:[#allocation7 + $0x1b0] sm:$0xff]
        %v1523 = vld [vmem:[#allocation7 + $0x1b8] sm:$0xff]
        %v1524 = vld [vmem:[#allocation7 + $0x1c0] sm:$0xff]
        %v1525 = vld [vmem:[#allocation7 + $0x1c8] sm:$0xff]
        %v1526 = vld [vmem:[#allocation7 + $0x1d0] sm:$0xff]
        %v1527 = vld [vmem:[#allocation7 + $0x1d8] sm:$0xff]
        %v1528 = vld [vmem:[#allocation7 + $0x1e0] sm:$0xff]
        %v1529 = vld [vmem:[#allocation7 + $0x1e8] sm:$0xff]
        %v1530 = vld [vmem:[#allocation7 + $0x1f0] sm:$0xff]
        %v1531 = vld [vmem:[#allocation7 + $0x1f8] sm:$0xff]
        %1532 = vmatprep.subr.mxu0 0.0
        %1533 = vmatpush1.msra.mxu0 %v1468
        %1534 = vmatprep.subr.mxu0 0.0
        %1535 = vmatpush1.msra.mxu0 %v1469
        %1536 = vmatprep.subr.mxu0 0.0
        %1537 = vmatpush1.msra.mxu0 %v1470
        %1538 = vmatprep.subr.mxu0 0.0
        %1539 = vmatpush1.msra.mxu0 %v1471
        %1540 = vmatprep.subr.mxu0 0.0
        %1541 = vmatpush1.msra.mxu0 %v1472
        %1542 = vmatprep.subr.mxu0 0.0
        %1543 = vmatpush1.msra.mxu0 %v1473
        %1544 = vmatprep.subr.mxu0 0.0
        %1545 = vmatpush1.msra.mxu0 %v1474
        %1546 = vmatprep.subr.mxu0 0.0
        %1547 = vmatpush1.msra.mxu0 %v1475
        %1548 = vmatprep.subr.mxu0 0.0
        %1549 = vmatpush1.msra.mxu0 %v1476
        %1550 = vmatprep.subr.mxu0 0.0
        %1551 = vmatpush1.msra.mxu0 %v1477
        %1552 = vmatprep.subr.mxu0 0.0
        %1553 = vmatpush1.msra.mxu0 %v1478
        %1554 = vmatprep.subr.mxu0 0.0
        %1555 = vmatpush1.msra.mxu0 %v1479
        %1556 = vmatprep.subr.mxu0 0.0
        %1557 = vmatpush1.msra.mxu0 %v1480
        %1558 = vmatprep.subr.mxu0 0.0
        %1559 = vmatpush1.msra.mxu0 %v1481
        %1560 = vmatprep.subr.mxu0 0.0
        %1561 = vmatpush1.msra.mxu0 %v1482
        %1562 = vmatprep.subr.mxu0 0.0
        %1563 = vmatpush1.msra.mxu0 %v1483
        %1564 = vmatprep.subr.mxu0 0.0
        %1565 = vmatpush1.msra.mxu0 %v1484
        %1566 = vmatprep.subr.mxu0 0.0
        %1567 = vmatpush1.msra.mxu0 %v1485
        %1568 = vmatprep.subr.mxu0 0.0
        %1569 = vmatpush1.msra.mxu0 %v1486
        %1570 = vmatprep.subr.mxu0 0.0
        %1571 = vmatpush1.msra.mxu0 %v1487
        %1572 = vmatprep.subr.mxu0 0.0
        %1573 = vmatpush1.msra.mxu0 %v1488
        %1574 = vmatprep.subr.mxu0 0.0
        %1575 = vmatpush1.msra.mxu0 %v1489
        %1576 = vmatprep.subr.mxu0 0.0
        %1577 = vmatpush1.msra.mxu0 %v1490
        %1578 = vmatprep.subr.mxu0 0.0
        %1579 = vmatpush1.msra.mxu0 %v1491
        %1580 = vmatprep.subr.mxu0 0.0
        %1581 = vmatpush1.msra.mxu0 %v1492
        %1582 = vmatprep.subr.mxu0 0.0
        %1583 = vmatpush1.msra.mxu0 %v1493
        %1584 = vmatprep.subr.mxu0 0.0
        %1585 = vmatpush1.msra.mxu0 %v1494
        %1586 = vmatprep.subr.mxu0 0.0
        %1587 = vmatpush1.msra.mxu0 %v1495
        %1588 = vmatprep.subr.mxu0 0.0
        %1589 = vmatpush1.msra.mxu0 %v1496
        %1590 = vmatprep.subr.mxu0 0.0
        %1591 = vmatpush1.msra.mxu0 %v1497
        %1592 = vmatprep.subr.mxu0 0.0
        %1593 = vmatpush1.msra.mxu0 %v1498
        %1594 = vmatprep.subr.mxu0 0.0
        %1595 = vmatpush1.msra.mxu0 %v1499
        %1596 = vmatprep.mubr.f32.mxu0 %v1465
        %1597 = vmatmul.mubr.f32.gmra.mrb[0].mxu0 %v1464
        %v1598 = vpop.f32.mrb[0].mxu0
        %v1599 = vadd.f32 0.0, %v1598
        %v1600 = vpop.f32.mrb[0].mxu0
        %1601 = vdwg.mxu0
        %1602 = vmatprep.subr.mxu0 0.0
        %1603 = vmatpush1.msra.mxu0 %v1500
        %1604 = vmatprep.subr.mxu0 0.0
        %1605 = vmatpush1.msra.mxu0 %v1501
        %1606 = vmatprep.subr.mxu0 0.0
        %1607 = vmatpush1.msra.mxu0 %v1502
        %1608 = vmatprep.subr.mxu0 0.0
        %1609 = vmatpush1.msra.mxu0 %v1503
        %1610 = vmatprep.subr.mxu0 0.0
        %1611 = vmatpush1.msra.mxu0 %v1504
        %1612 = vmatprep.subr.mxu0 0.0
        %1613 = vmatpush1.msra.mxu0 %v1505
        %1614 = vmatprep.subr.mxu0 0.0
        %1615 = vmatpush1.msra.mxu0 %v1506
        %1616 = vmatprep.subr.mxu0 0.0
        %1617 = vmatpush1.msra.mxu0 %v1507
        %1618 = vmatprep.subr.mxu0 0.0
        %1619 = vmatpush1.msra.mxu0 %v1508
        %1620 = vmatprep.subr.mxu0 0.0
        %1621 = vmatpush1.msra.mxu0 %v1509
        %1622 = vmatprep.subr.mxu0 0.0
        %1623 = vmatpush1.msra.mxu0 %v1510
        %1624 = vmatprep.subr.mxu0 0.0
        %1625 = vmatpush1.msra.mxu0 %v1511
        %1626 = vmatprep.subr.mxu0 0.0
        %1627 = vmatpush1.msra.mxu0 %v1512
        %1628 = vmatprep.subr.mxu0 0.0
        %1629 = vmatpush1.msra.mxu0 %v1513
        %1630 = vmatprep.subr.mxu0 0.0
        %1631 = vmatpush1.msra.mxu0 %v1514
        %1632 = vmatprep.subr.mxu0 0.0
        %1633 = vmatpush1.msra.mxu0 %v1515
        %1634 = vmatprep.subr.mxu0 0.0
        %1635 = vmatpush1.msra.mxu0 %v1516
        %1636 = vmatprep.subr.mxu0 0.0
        %1637 = vmatpush1.msra.mxu0 %v1517
        %1638 = vmatprep.subr.mxu0 0.0
        %1639 = vmatpush1.msra.mxu0 %v1518
        %1640 = vmatprep.subr.mxu0 0.0
        %1641 = vmatpush1.msra.mxu0 %v1519
        %1642 = vmatprep.subr.mxu0 0.0
        %1643 = vmatpush1.msra.mxu0 %v1520
        %1644 = vmatprep.subr.mxu0 0.0
        %1645 = vmatpush1.msra.mxu0 %v1521
        %1646 = vmatprep.subr.mxu0 0.0
        %1647 = vmatpush1.msra.mxu0 %v1522
        %1648 = vmatprep.subr.mxu0 0.0
        %1649 = vmatpush1.msra.mxu0 %v1523
        %1650 = vmatprep.subr.mxu0 0.0
        %1651 = vmatpush1.msra.mxu0 %v1524
        %1652 = vmatprep.subr.mxu0 0.0
        %1653 = vmatpush1.msra.mxu0 %v1525
        %1654 = vmatprep.subr.mxu0 0.0
        %1655 = vmatpush1.msra.mxu0 %v1526
        %1656 = vmatprep.subr.mxu0 0.0
        %1657 = vmatpush1.msra.mxu0 %v1527
        %1658 = vmatprep.subr.mxu0 0.0
        %1659 = vmatpush1.msra.mxu0 %v1528
        %1660 = vmatprep.subr.mxu0 0.0
        %1661 = vmatpush1.msra.mxu0 %v1529
        %1662 = vmatprep.subr.mxu0 0.0
        %1663 = vmatpush1.msra.mxu0 %v1530
        %1664 = vmatprep.subr.mxu0 0.0
        %1665 = vmatpush1.msra.mxu0 %v1531
        %1666 = vmatprep.mubr.f32.mxu0 %v1467
        %1667 = vmatmul.mubr.f32.gmra.mrb[0].mxu0 %v1466
        %v1668 = vpop.f32.mrb[0].mxu0
        %v1669 = vadd.f32 %v1599, %v1668
        %v1670 = vpop.f32.mrb[0].mxu0
        %1671 = vdwg.mxu0
        %v1672 = vld [vmem:[%s5] sm:$0x1]
        %v1674 = vlaneseq
        %v1675 = vshrl.u32 %v1674, 7
        %v1676 = vsub.s32 0, %v1675
        %v1677 = vrot.slane %v1672, %v1676
        %v1679 = vsub.f32 %v1677, %v1669
        %v1680 = vmax.f32 %v1679, 0.0
        %vm1681 = vcmask 261120
        %v1682 = vsel %vm1681, %v1680, -inf
        %1683 = vmax.xlane.f32.xlu0 %v1682
        %v1684 = vpop.xlane.xlu0 %1683
        %v1685 = vsub.f32 %v1680, %v1684
        %v1686 = vmul.f32 %v1685, 1.442695
        %v1687 = vpow.pop %v1686
        %v1688 = vld [vmem:[#allocation9] sm:$0xff]
        %v1689 = vld [vmem:[#allocation9 + $0x8] sm:$0xff]
        %v1690 = vld [vmem:[#allocation9 + $0x10] sm:$0xff]
        %v1691 = vld [vmem:[#allocation9 + $0x18] sm:$0xff]
        %v1693 = vsel %vm1681, %v1687, 0
        %1695 = vmatprep.subr.mxu0 0.0
        %1696 = vmatpush1.msra.mxu0 %v1688
        %1697 = vmatprep.subr.mxu0 0.0
        %1698 = vmatpush1.msra.mxu0 %v1689
        %1699 = vmatprep.subr.mxu0 0.0
        %1700 = vmatpush1.msra.mxu0 %v1690
        %1701 = vmatprep.subr.mxu0 0.0
        %1702 = vmatpush1.msra.mxu0 %v1691
        %1703 = vmatprep.subr.mxu0 0.0
        %1704 = vmatpush1.msra.mxu0 0.0
        %1705 = vmatprep.subr.mxu0 0.0
        %1706 = vmatpush1.msra.mxu0 0.0
        %1707 = vmatprep.subr.mxu0 0.0
        %1708 = vmatpush1.msra.mxu0 0.0
        %1709 = vmatprep.subr.mxu0 0.0
        %1710 = vmatpush1.msra.mxu0 0.0
        %1711 = vmatprep.subr.mxu0 0.0
        %1712 = vmatpush1.msra.mxu0 0.0
        %1713 = vmatprep.subr.mxu0 0.0
        %1714 = vmatpush1.msra.mxu0 0.0
        %1715 = vmatprep.subr.mxu0 0.0
        %1716 = vmatpush1.msra.mxu0 0.0
        %1717 = vmatprep.subr.mxu0 0.0
        %1718 = vmatpush1.msra.mxu0 0.0
        %1719 = vmatprep.subr.mxu0 0.0
        %1720 = vmatpush1.msra.mxu0 0.0
        %1721 = vmatprep.subr.mxu0 0.0
        %1722 = vmatpush1.msra.mxu0 0.0
        %1723 = vmatprep.subr.mxu0 0.0
        %1724 = vmatpush1.msra.mxu0 0.0
        %1725 = vmatprep.subr.mxu0 0.0
        %1726 = vmatpush1.msra.mxu0 0.0
        %1727 = vmatprep.subr.mxu0 0.0
        %1728 = vmatpush1.msra.mxu0 0.0
        %1729 = vmatprep.subr.mxu0 0.0
        %1730 = vmatpush1.msra.mxu0 0.0
        %1731 = vmatprep.subr.mxu0 0.0
        %1732 = vmatpush1.msra.mxu0 0.0
        %1733 = vmatprep.subr.mxu0 0.0
        %1734 = vmatpush1.msra.mxu0 0.0
        %1735 = vmatprep.subr.mxu0 0.0
        %1736 = vmatpush1.msra.mxu0 0.0
        %1737 = vmatprep.subr.mxu0 0.0
        %1738 = vmatpush1.msra.mxu0 0.0
        %1739 = vmatprep.subr.mxu0 0.0
        %1740 = vmatpush1.msra.mxu0 0.0
        %1741 = vmatprep.subr.mxu0 0.0
        %1742 = vmatpush1.msra.mxu0 0.0
        %1743 = vmatprep.subr.mxu0 0.0
        %1744 = vmatpush1.msra.mxu0 0.0
        %1745 = vmatprep.subr.mxu0 0.0
        %1746 = vmatpush1.msra.mxu0 0.0
        %1747 = vmatprep.subr.mxu0 0.0
        %1748 = vmatpush1.msra.mxu0 0.0
        %1749 = vmatprep.subr.mxu0 0.0
        %1750 = vmatpush1.msra.mxu0 0.0
        %1751 = vmatprep.subr.mxu0 0.0
        %1752 = vmatpush1.msra.mxu0 0.0
        %1753 = vmatprep.subr.mxu0 0.0
        %1754 = vmatpush1.msra.mxu0 0.0
        %1755 = vmatprep.subr.mxu0 0.0
        %1756 = vmatpush1.msra.mxu0 0.0
        %1757 = vmatprep.subr.mxu0 0.0
        %1758 = vmatpush1.msra.mxu0 0.0
        %1759 = vmatprep.mubr.f32.mxu0 0.0
        %1760 = vmatmul.mubr.f32.gmra.mrb[0].mxu0 %v1693
        %v1761 = vpop.f32.mrb[0].mxu0
        %v1762 = vadd.f32 0.0, %v1761
        %v1763 = vpop.f32.mrb[0].mxu0
        %1764 = vdwg.mxu0
        %v1765 = vrcp.pop %v1762
        %v1766 = vmul.f32 %v1687, %v1765
        %v1767 = vld [vmem:[%s7] sm:$0xff]
        %v1768 = vld [vmem:[%s7 + $0x8] sm:$0xff]
        %v1769 = vld [vmem:[%s7 + $0x10] sm:$0xff]
        %v1770 = vld [vmem:[%s7 + $0x18] sm:$0xff]
        %v1771 = vld [vmem:[%s7 + $0x20] sm:$0xff]
        %v1772 = vld [vmem:[%s7 + $0x28] sm:$0xff]
        %v1773 = vld [vmem:[%s7 + $0x30] sm:$0xff]
        %v1774 = vld [vmem:[%s7 + $0x38] sm:$0xff]
        %v1776 = vsel %vm1681, %v1766, 0
        %1778 = vmatprep.subr.mxu0 %v1768
        %1779 = vmatpush1.msra.mxu0 %v1767
        %1780 = vmatprep.subr.mxu0 %v1770
        %1781 = vmatpush1.msra.mxu0 %v1769
        %1782 = vmatprep.subr.mxu0 %v1772
        %1783 = vmatpush1.msra.mxu0 %v1771
        %1784 = vmatprep.subr.mxu0 %v1774
        %1785 = vmatpush1.msra.mxu0 %v1773
        %1786 = vmatprep.subr.mxu0 0.0
        %1787 = vmatpush1.msra.mxu0 0.0
        %1788 = vmatprep.subr.mxu0 0.0
        %1789 = vmatpush1.msra.mxu0 0.0
        %1790 = vmatprep.subr.mxu0 0.0
        %1791 = vmatpush1.msra.mxu0 0.0
        %1792 = vmatprep.subr.mxu0 0.0
        %1793 = vmatpush1.msra.mxu0 0.0
        %1794 = vmatprep.subr.mxu0 0.0
        %1795 = vmatpush1.msra.mxu0 0.0
        %1796 = vmatprep.subr.mxu0 0.0
        %1797 = vmatpush1.msra.mxu0 0.0
        %1798 = vmatprep.subr.mxu0 0.0
        %1799 = vmatpush1.msra.mxu0 0.0
        %1800 = vmatprep.subr.mxu0 0.0
        %1801 = vmatpush1.msra.mxu0 0.0
        %1802 = vmatprep.subr.mxu0 0.0
        %1803 = vmatpush1.msra.mxu0 0.0
        %1804 = vmatprep.subr.mxu0 0.0
        %1805 = vmatpush1.msra.mxu0 0.0
        %1806 = vmatprep.subr.mxu0 0.0
        %1807 = vmatpush1.msra.mxu0 0.0
        %1808 = vmatprep.subr.mxu0 0.0
        %1809 = vmatpush1.msra.mxu0 0.0
        %1810 = vmatprep.subr.mxu0 0.0
        %1811 = vmatpush1.msra.mxu0 0.0
        %1812 = vmatprep.subr.mxu0 0.0
        %1813 = vmatpush1.msra.mxu0 0.0
        %1814 = vmatprep.subr.mxu0 0.0
        %1815 = vmatpush1.msra.mxu0 0.0
        %1816 = vmatprep.subr.mxu0 0.0
        %1817 = vmatpush1.msra.mxu0 0.0
        %1818 = vmatprep.subr.mxu0 0.0
        %1819 = vmatpush1.msra.mxu0 0.0
        %1820 = vmatprep.subr.mxu0 0.0
        %1821 = vmatpush1.msra.mxu0 0.0
        %1822 = vmatprep.subr.mxu0 0.0
        %1823 = vmatpush1.msra.mxu0 0.0
        %1824 = vmatprep.subr.mxu0 0.0
        %1825 = vmatpush1.msra.mxu0 0.0
        %1826 = vmatprep.subr.mxu0 0.0
        %1827 = vmatpush1.msra.mxu0 0.0
        %1828 = vmatprep.subr.mxu0 0.0
        %1829 = vmatpush1.msra.mxu0 0.0
        %1830 = vmatprep.subr.mxu0 0.0
        %1831 = vmatpush1.msra.mxu0 0.0
        %1832 = vmatprep.subr.mxu0 0.0
        %1833 = vmatpush1.msra.mxu0 0.0
        %1834 = vmatprep.subr.mxu0 0.0
        %1835 = vmatpush1.msra.mxu0 0.0
        %1836 = vmatprep.subr.mxu0 0.0
        %1837 = vmatpush1.msra.mxu0 0.0
        %1838 = vmatprep.subr.mxu0 0.0
        %1839 = vmatpush1.msra.mxu0 0.0
        %1840 = vmatprep.subr.mxu0 0.0
        %1841 = vmatpush1.msra.mxu0 0.0
        %1842 = vmatprep.mubr.f32.mxu0 0.0
        %1843 = vmatmul.mubr.f32.gmra.mrb[0].mxu0 %v1776
        %v1844 = vpop.f32.mrb[0].mxu0
        %v1845 = vadd.f32 0.0, %v1844
        %v1846 = vpop.f32.mrb[0].mxu0
        %v1847 = vadd.f32 0.0, %v1846
        %1848 = vdwg.mxu0
        %v1849 = vmul.f32 %v1845, %v626
        %v1850 = vmul.f32 %v1847, %v628
        %v1851 = vld [vmem:[#allocation10] sm:$0xff]
        %v1852 = vld [vmem:[#allocation10 + $0x8] sm:$0xff]
        %v1853 = vld [vmem:[#allocation10 + $0x10] sm:$0xff]
        %v1854 = vld [vmem:[#allocation10 + $0x18] sm:$0xff]
        %v1855 = vld [vmem:[#allocation10 + $0x20] sm:$0xff]
        %v1856 = vld [vmem:[#allocation10 + $0x28] sm:$0xff]
        %v1857 = vld [vmem:[#allocation10 + $0x30] sm:$0xff]
        %v1858 = vld [vmem:[#allocation10 + $0x38] sm:$0xff]
        %v1859 = vld [vmem:[#allocation10 + $0x40] sm:$0xff]
        %v1860 = vld [vmem:[#allocation10 + $0x48] sm:$0xff]
        %v1861 = vld [vmem:[#allocation10 + $0x50] sm:$0xff]
        %v1862 = vld [vmem:[#allocation10 + $0x58] sm:$0xff]
        %v1863 = vld [vmem:[#allocation10 + $0x60] sm:$0xff]
        %v1864 = vld [vmem:[#allocation10 + $0x68] sm:$0xff]
        %v1865 = vld [vmem:[#allocation10 + $0x70] sm:$0xff]
        %v1866 = vld [vmem:[#allocation10 + $0x78] sm:$0xff]
        %v1867 = vld [vmem:[#allocation10 + $0x80] sm:$0xff]
        %v1868 = vld [vmem:[#allocation10 + $0x88] sm:$0xff]
        %v1869 = vld [vmem:[#allocation10 + $0x90] sm:$0xff]
        %v1870 = vld [vmem:[#allocation10 + $0x98] sm:$0xff]
        %v1871 = vld [vmem:[#allocation10 + $0xa0] sm:$0xff]
        %v1872 = vld [vmem:[#allocation10 + $0xa8] sm:$0xff]
        %v1873 = vld [vmem:[#allocation10 + $0xb0] sm:$0xff]
        %v1874 = vld [vmem:[#allocation10 + $0xb8] sm:$0xff]
        %v1875 = vld [vmem:[#allocation10 + $0xc0] sm:$0xff]
        %v1876 = vld [vmem:[#allocation10 + $0xc8] sm:$0xff]
        %v1877 = vld [vmem:[#allocation10 + $0xd0] sm:$0xff]
        %v1878 = vld [vmem:[#allocation10 + $0xd8] sm:$0xff]
        %v1879 = vld [vmem:[#allocation10 + $0xe0] sm:$0xff]
        %v1880 = vld [vmem:[#allocation10 + $0xe8] sm:$0xff]
        %v1881 = vld [vmem:[#allocation10 + $0xf0] sm:$0xff]
        %v1882 = vld [vmem:[#allocation10 + $0xf8] sm:$0xff]
        %1883 = vmatprep.subr.mxu0 0.0
        %1884 = vmatpush1.msra.mxu0 %v1851
        %1885 = vmatprep.subr.mxu0 0.0
        %1886 = vmatpush1.msra.mxu0 %v1852
        %1887 = vmatprep.subr.mxu0 0.0
        %1888 = vmatpush1.msra.mxu0 %v1853
        %1889 = vmatprep.subr.mxu0 0.0
        %1890 = vmatpush1.msra.mxu0 %v1854
        %1891 = vmatprep.subr.mxu0 0.0
        %1892 = vmatpush1.msra.mxu0 %v1855
        %1893 = vmatprep.subr.mxu0 0.0
        %1894 = vmatpush1.msra.mxu0 %v1856
        %1895 = vmatprep.subr.mxu0 0.0
        %1896 = vmatpush1.msra.mxu0 %v1857
        %1897 = vmatprep.subr.mxu0 0.0
        %1898 = vmatpush1.msra.mxu0 %v1858
        %1899 = vmatprep.subr.mxu0 0.0
        %1900 = vmatpush1.msra.mxu0 %v1859
        %1901 = vmatprep.subr.mxu0 0.0
        %1902 = vmatpush1.msra.mxu0 %v1860
        %1903 = vmatprep.subr.mxu0 0.0
        %1904 = vmatpush1.msra.mxu0 %v1861
        %1905 = vmatprep.subr.mxu0 0.0
        %1906 = vmatpush1.msra.mxu0 %v1862
        %1907 = vmatprep.subr.mxu0 0.0
        %1908 = vmatpush1.msra.mxu0 %v1863
        %1909 = vmatprep.subr.mxu0 0.0
        %1910 = vmatpush1.msra.mxu0 %v1864
        %1911 = vmatprep.subr.mxu0 0.0
        %1912 = vmatpush1.msra.mxu0 %v1865
        %1913 = vmatprep.subr.mxu0 0.0
        %1914 = vmatpush1.msra.mxu0 %v1866
        %1915 = vmatprep.subr.mxu0 0.0
        %1916 = vmatpush1.msra.mxu0 %v1867
        %1917 = vmatprep.subr.mxu0 0.0
        %1918 = vmatpush1.msra.mxu0 %v1868
        %1919 = vmatprep.subr.mxu0 0.0
        %1920 = vmatpush1.msra.mxu0 %v1869
        %1921 = vmatprep.subr.mxu0 0.0
        %1922 = vmatpush1.msra.mxu0 %v1870
        %1923 = vmatprep.subr.mxu0 0.0
        %1924 = vmatpush1.msra.mxu0 %v1871
        %1925 = vmatprep.subr.mxu0 0.0
        %1926 = vmatpush1.msra.mxu0 %v1872
        %1927 = vmatprep.subr.mxu0 0.0
        %1928 = vmatpush1.msra.mxu0 %v1873
        %1929 = vmatprep.subr.mxu0 0.0
        %1930 = vmatpush1.msra.mxu0 %v1874
        %1931 = vmatprep.subr.mxu0 0.0
        %1932 = vmatpush1.msra.mxu0 %v1875
        %1933 = vmatprep.subr.mxu0 0.0
        %1934 = vmatpush1.msra.mxu0 %v1876
        %1935 = vmatprep.subr.mxu0 0.0
        %1936 = vmatpush1.msra.mxu0 %v1877
        %1937 = vmatprep.subr.mxu0 0.0
        %1938 = vmatpush1.msra.mxu0 %v1878
        %1939 = vmatprep.subr.mxu0 0.0
        %1940 = vmatpush1.msra.mxu0 %v1879
        %1941 = vmatprep.subr.mxu0 0.0
        %1942 = vmatpush1.msra.mxu0 %v1880
        %1943 = vmatprep.subr.mxu0 0.0
        %1944 = vmatpush1.msra.mxu0 %v1881
        %1945 = vmatprep.subr.mxu0 0.0
        %1946 = vmatpush1.msra.mxu0 %v1882
        %1947 = vmatprep.mubr.f32.mxu0 %v1850
        %1948 = vmatmul.mubr.f32.gmra.mrb[0].mxu0 %v1849
        %v1949 = vpop.f32.mrb[0].mxu0
        %v1950 = vadd.f32 0.0, %v1949
        %v1951 = vpop.f32.mrb[0].mxu0
        %1952 = vdwg.mxu0
        %v1953 = vmul.f32 %v1950, %v1950
        %v1954 = vld [vmem:[#allocation12] sm:$0xff]
        %v1955 = vld [vmem:[#allocation12 + $0x8] sm:$0xff]
        %v1956 = vld [vmem:[#allocation12 + $0x10] sm:$0xff]
        %v1957 = vld [vmem:[#allocation12 + $0x18] sm:$0xff]
        %v1959 = vsel %vm1681, %v1953, 0
        %1961 = vmatprep.subr.mxu0 0.0
        %1962 = vmatpush1.msra.mxu0 %v1954
        %1963 = vmatprep.subr.mxu0 0.0
        %1964 = vmatpush1.msra.mxu0 %v1955
        %1965 = vmatprep.subr.mxu0 0.0
        %1966 = vmatpush1.msra.mxu0 %v1956
        %1967 = vmatprep.subr.mxu0 0.0
        %1968 = vmatpush1.msra.mxu0 %v1957
        %1969 = vmatprep.subr.mxu0 0.0
        %1970 = vmatpush1.msra.mxu0 0.0
        %1971 = vmatprep.subr.mxu0 0.0
        %1972 = vmatpush1.msra.mxu0 0.0
        %1973 = vmatprep.subr.mxu0 0.0
        %1974 = vmatpush1.msra.mxu0 0.0
        %1975 = vmatprep.subr.mxu0 0.0
        %1976 = vmatpush1.msra.mxu0 0.0
        %1977 = vmatprep.subr.mxu0 0.0
        %1978 = vmatpush1.msra.mxu0 0.0
        %1979 = vmatprep.subr.mxu0 0.0
        %1980 = vmatpush1.msra.mxu0 0.0
        %1981 = vmatprep.subr.mxu0 0.0
        %1982 = vmatpush1.msra.mxu0 0.0
        %1983 = vmatprep.subr.mxu0 0.0
        %1984 = vmatpush1.msra.mxu0 0.0
        %1985 = vmatprep.subr.mxu0 0.0
        %1986 = vmatpush1.msra.mxu0 0.0
        %1987 = vmatprep.subr.mxu0 0.0
        %1988 = vmatpush1.msra.mxu0 0.0
        %1989 = vmatprep.subr.mxu0 0.0
        %1990 = vmatpush1.msra.mxu0 0.0
        %1991 = vmatprep.subr.mxu0 0.0
        %1992 = vmatpush1.msra.mxu0 0.0
        %1993 = vmatprep.subr.mxu0 0.0
        %1994 = vmatpush1.msra.mxu0 0.0
        %1995 = vmatprep.subr.mxu0 0.0
        %1996 = vmatpush1.msra.mxu0 0.0
        %1997 = vmatprep.subr.mxu0 0.0
        %1998 = vmatpush1.msra.mxu0 0.0
        %1999 = vmatprep.subr.mxu0 0.0
        %2000 = vmatpush1.msra.mxu0 0.0
        %2001 = vmatprep.subr.mxu0 0.0
        %2002 = vmatpush1.msra.mxu0 0.0
        %2003 = vmatprep.subr.mxu0 0.0
        %2004 = vmatpush1.msra.mxu0 0.0
        %2005 = vmatprep.subr.mxu0 0.0
        %2006 = vmatpush1.msra.mxu0 0.0
        %2007 = vmatprep.subr.mxu0 0.0
        %2008 = vmatpush1.msra.mxu0 0.0
        %2009 = vmatprep.subr.mxu0 0.0
        %2010 = vmatpush1.msra.mxu0 0.0
        %2011 = vmatprep.subr.mxu0 0.0
        %2012 = vmatpush1.msra.mxu0 0.0
        %2013 = vmatprep.subr.mxu0 0.0
        %2014 = vmatpush1.msra.mxu0 0.0
        %2015 = vmatprep.subr.mxu0 0.0
        %2016 = vmatpush1.msra.mxu0 0.0
        %2017 = vmatprep.subr.mxu0 0.0
        %2018 = vmatpush1.msra.mxu0 0.0
        %2019 = vmatprep.subr.mxu0 0.0
        %2020 = vmatpush1.msra.mxu0 0.0
        %2021 = vmatprep.subr.mxu0 0.0
        %2022 = vmatpush1.msra.mxu0 0.0
        %2023 = vmatprep.subr.mxu0 0.0
        %2024 = vmatpush1.msra.mxu0 0.0
        %2025 = vmatprep.mubr.f32.mxu0 0.0
        %2026 = vmatmul.mubr.f32.gmra.mrb[0].mxu0 %v1959
        %v2027 = vpop.f32.mrb[0].mxu0
        %v2028 = vadd.f32 1e-05, %v2027
        %v2029 = vpop.f32.mrb[0].mxu0
        %2030 = vdwg.mxu0
        %v2031 = vrsqrt.pop %v2028
        %v2032 = vmul.f32 %v1950, %v2031
        %v2033 = vld [vmem:[#allocation13] sm:$0xff]
        %v2034 = vld [vmem:[#allocation13 + $0x8] sm:$0xff]
        %v2035 = vld [vmem:[#allocation13 + $0x10] sm:$0xff]
        %v2036 = vld [vmem:[#allocation13 + $0x18] sm:$0xff]
        %v2037 = vld [vmem:[%s11] sm:$0x1]
        %v2039 = vlaneseq
        %v2040 = vshrl.u32 %v2039, 7
        %v2041 = vsub.s32 0, %v2040
        %v2042 = vrot.slane %v2037, %v2041
        %v2045 = vsel %vm1681, %v2032, 0
        %2047 = vmatprep.subr.mxu0 0.0
        %2048 = vmatpush1.msra.mxu0 %v2033
        %2049 = vmatprep.subr.mxu0 0.0
        %2050 = vmatpush1.msra.mxu0 %v2034
        %2051 = vmatprep.subr.mxu0 0.0
        %2052 = vmatpush1.msra.mxu0 %v2035
        %2053 = vmatprep.subr.mxu0 0.0
        %2054 = vmatpush1.msra.mxu0 %v2036
        %2055 = vmatprep.subr.mxu0 0.0
        %2056 = vmatpush1.msra.mxu0 0.0
        %2057 = vmatprep.subr.mxu0 0.0
        %2058 = vmatpush1.msra.mxu0 0.0
        %2059 = vmatprep.subr.mxu0 0.0
        %2060 = vmatpush1.msra.mxu0 0.0
        %2061 = vmatprep.subr.mxu0 0.0
        %2062 = vmatpush1.msra.mxu0 0.0
        %2063 = vmatprep.subr.mxu0 0.0
        %2064 = vmatpush1.msra.mxu0 0.0
        %2065 = vmatprep.subr.mxu0 0.0
        %2066 = vmatpush1.msra.mxu0 0.0
        %2067 = vmatprep.subr.mxu0 0.0
        %2068 = vmatpush1.msra.mxu0 0.0
        %2069 = vmatprep.subr.mxu0 0.0
        %2070 = vmatpush1.msra.mxu0 0.0
        %2071 = vmatprep.subr.mxu0 0.0
        %2072 = vmatpush1.msra.mxu0 0.0
        %2073 = vmatprep.subr.mxu0 0.0
        %2074 = vmatpush1.msra.mxu0 0.0
        %2075 = vmatprep.subr.mxu0 0.0
        %2076 = vmatpush1.msra.mxu0 0.0
        %2077 = vmatprep.subr.mxu0 0.0
        %2078 = vmatpush1.msra.mxu0 0.0
        %2079 = vmatprep.subr.mxu0 0.0
        %2080 = vmatpush1.msra.mxu0 0.0
        %2081 = vmatprep.subr.mxu0 0.0
        %2082 = vmatpush1.msra.mxu0 0.0
        %2083 = vmatprep.subr.mxu0 0.0
        %2084 = vmatpush1.msra.mxu0 0.0
        %2085 = vmatprep.subr.mxu0 0.0
        %2086 = vmatpush1.msra.mxu0 0.0
        %2087 = vmatprep.subr.mxu0 0.0
        %2088 = vmatpush1.msra.mxu0 0.0
        %2089 = vmatprep.subr.mxu0 0.0
        %2090 = vmatpush1.msra.mxu0 0.0
        %2091 = vmatprep.subr.mxu0 0.0
        %2092 = vmatpush1.msra.mxu0 0.0
        %2093 = vmatprep.subr.mxu0 0.0
        %2094 = vmatpush1.msra.mxu0 0.0
        %2095 = vmatprep.subr.mxu0 0.0
        %2096 = vmatpush1.msra.mxu0 0.0
        %2097 = vmatprep.subr.mxu0 0.0
        %2098 = vmatpush1.msra.mxu0 0.0
        %2099 = vmatprep.subr.mxu0 0.0
        %2100 = vmatpush1.msra.mxu0 0.0
        %2101 = vmatprep.subr.mxu0 0.0
        %2102 = vmatpush1.msra.mxu0 0.0
        %2103 = vmatprep.subr.mxu0 0.0
        %2104 = vmatpush1.msra.mxu0 0.0
        %2105 = vmatprep.subr.mxu0 0.0
        %2106 = vmatpush1.msra.mxu0 0.0
        %2107 = vmatprep.subr.mxu0 0.0
        %2108 = vmatpush1.msra.mxu0 0.0
        %2109 = vmatprep.subr.mxu0 0.0
        %2110 = vmatpush1.msra.mxu0 0.0
        %2111 = vmatprep.mubr.f32.mxu0 0.0
        %2112 = vmatmul.mubr.f32.gmra.mrb[0].mxu0 %v2045
        %v2113 = vpop.f32.mrb[0].mxu0
        %v2114 = vadd.f32 %v2042, %v2113
        %v2115 = vpop.f32.mrb[0].mxu0
        %2116 = vdwg.mxu0
        %2117 = vst [vmem:[%s525] sm:$0xff] %v2114
        %p2118 = scmp.lt.s32.totalorder %s28, 1
        %s2119 = scalar_select %p2118, %s28, 1
        %s2120 = smul.addr %s2119, 8
        %s2121 = scalar_lea.vmem %s12, %s2120
        // Predicated region
        $region101: #{infer_capsule_apply.1} parent=67 // pred_check
          %p2122 = pneg %p303
        $region102: #{infer_capsule_apply.1} parent=67 // pred_check_branch
          %2124 = sbr.rel (%p2122) target = $region104
        $region103: #{infer_capsule_apply.1} parent=67 // pred_region
          _
        $region104: #{infer_capsule_apply.1} parent=67 // pred_fallthru
          _
      $region68: #{infer_capsule_apply.1} parent=5 // pred_fallthru
        _
      %p2125 = scmp.le.s32.totalorder 2, %s23
      // Predicated region
      $region105: #{infer_capsule_apply.1} parent=5 // pred_check
        %p2126 = pneg %p2125
      $region106: #{infer_capsule_apply.1} parent=5 // pred_check_branch
        %2128 = sbr.rel (%p2126) target = $region108
      $region107: #{infer_capsule_apply.1} parent=5 // pred_region
        %s2129 = ssub.s32 %s23, 2
        // Predicated region
        $region109: #{infer_capsule_apply.1} parent=107 // pred_check
          %p2130 = pneg %p309
        $region110: #{infer_capsule_apply.1} parent=107 // pred_check_branch
          %2132 = sbr.rel (%p2130) target = $region112
        $region111: #{infer_capsule_apply.1} parent=107 // pred_region
          %p2133 = scmp.lt.s32.totalorder %s29, 1
          %s2134 = scalar_select %p2133, %s29, 1
          %s2135 = smul.addr %s2134, 8
          %s2136 = scalar_lea.vmem %s12, %s2135
        $region112: #{infer_capsule_apply.1} parent=107 // pred_fallthru
          _
      $region108: #{infer_capsule_apply.1} parent=5 // pred_fallthru
        _
    $region6: #{infer_capsule_apply.1} parent=1 // loop_footer
      %s27 = sadd.s32 1, %s23
    $region7: #{infer_capsule_apply.1} parent=1 // loop_footer_branch
      %22 = sbr.rel target = $region3
    $region8: #{infer_capsule_apply.1} parent=1 // loop_exit
      _
    %2137 = vsyncpa [#allocation3], 1
    %s2138 = scalar_lea.sflag [#allocation3], 1
    %2139 = vsyncpa %s2138, 1
    %2140 = vsyncpa [#allocation5], 1
    %2141 = vsyncpa [#allocation8], 1
    %2142 = vsyncpa [#allocation11], 1
    %2143 = vsyncpa [#allocation14], 1

</llo_original>
